<compile_context>
chip_gen: v7x
topology: tpu7x:2x2x1
jax: 0.10.0
libtpu: 0.0.40
codegen_flags: <defaults>
</compile_context>

<pallas_src>
import jax
import jax.numpy as jnp
from jax.experimental import pallas as pl
from jax.experimental.pallas import tpu as pltpu

LANES = 128  # channel padding target (TPU lane width)


def _round_up(x, m):
    return ((x + m - 1) // m) * m


# ----------------------------------------------------------------------------
# Fused kernel: nf1 = conv(x); nf2 = conv(relu(nf1)); gf = seg @ nf2
#   conv(x) = A_cols @ [x@W_0 ; ... ; x@W_{R-1} ; x@root] + bias
# where a_ref is the COLUMN-stacked adjacency (N, (R+1)*N) whose last block is the
# identity (self-loop / root weight) and w_ref stacks [W_0..W_{R-1}, root].
# ----------------------------------------------------------------------------
def _rgcn_fused_kernel(x_ref, a_ref, w_ref, bias_ref, seg_ref,
                       gf_ref, nf1_ref, nf2_ref, y_ref):
    n = x_ref.shape[0]          # padded node count (multiple of 8)
    ra = w_ref.shape[0]         # num_relations + 1 (last = root / self-loop)
    bias = bias_ref[...]        # (1, 128) f32

    def conv(x):
        # Transform: (R+1) lane-dense (n,128)@(128,128) matmuls into VMEM scratch.
        for r in range(ra):     # small static unroll (R+1)
            y_ref[r * n:(r + 1) * n, :] = jnp.dot(
                x, w_ref[r], preferred_element_type=jnp.float32)
        # Aggregate: ONE matmul with contraction K = (R+1)*n (fills MXU depth).
        return jnp.dot(a_ref[...], y_ref[...],
                       preferred_element_type=jnp.float32) + bias

    nf1 = conv(x_ref[...])                       # layer 1 (pre-ReLU, as in PyTorch)
    nf1_ref[...] = nf1
    nf2 = conv(jnp.maximum(nf1, 0.0))            # ReLU applied exactly once
    nf2_ref[...] = nf2
    # global_add_pool as a lane-dense segment matmul on the resident nf2.
    gf_ref[...] = jnp.dot(seg_ref[...], nf2, preferred_element_type=jnp.float32)


# ----------------------------------------------------------------------------
# Glue: dense per-relation mean-normalized adjacency, parameters, padding.
# ----------------------------------------------------------------------------
def build_relation_adjacency(edge_index, edge_type, num_nodes, num_relations):
    src, dst = edge_index[0], edge_index[1]
    a = jnp.zeros((num_relations, num_nodes, num_nodes), jnp.float32)
    a = a.at[edge_type, dst, src].add(1.0)          # count edges j->i of type r
    deg = jnp.sum(a, axis=-1, keepdims=True)        # per-relation in-degree
    return a / jnp.maximum(deg, 1.0)                # mean aggregation (PyG default)


def init_params(key, in_channels, num_relations, num_bases=30):
    k1, k2, k3 = jax.random.split(key, 3)
    scale = (2.0 / (in_channels + in_channels)) ** 0.5
    weight_basis = jax.random.normal(
        k1, (num_bases, in_channels, in_channels), jnp.float32) * scale
    comp = jax.random.normal(
        k2, (num_relations, num_bases), jnp.float32) * (1.0 / num_bases) ** 0.5
    root = jax.random.normal(
        k3, (in_channels, in_channels), jnp.float32) * scale
    bias = jnp.zeros((in_channels,), jnp.float32)
    return weight_basis, comp, root, bias


def rgcn_forward(x, edge_index, edge_type, batch, params, num_relations, num_graphs):
    weight_basis, comp, root, bias = params
    num_bases, c, _ = weight_basis.shape
    n = x.shape[0]
    ra = num_relations + 1

    # Pad nodes: multiple of 8 (sublane alignment of the Y-stack writes) and large
    # enough that the aggregation contraction K = (R+1)*n_pad fills the MXU (>=128).
    n_pad = _round_up(n, 8)
    if ra * n_pad < LANES:
        n_pad = _round_up(-(-LANES // ra), 8)
    g_pad = _round_up(num_graphs, 8)

    # Basis decomposition: W_r = sum_b comp[r, b] * basis[b] (parameter glue).
    w = (comp @ weight_basis.reshape(num_bases, c * c)).reshape(num_relations, c, c)
    w_aug = jnp.concatenate([w, root[None]], axis=0)                  # (R+1, C, C)
    w_pad = jnp.zeros((ra, LANES, LANES), jnp.float32).at[:, :c, :c].set(w_aug)

    # Dense mean-normalized adjacency per relation + identity for the root term,
    # COLUMN-stacked so a single aggregation matmul covers every relation:
    #   a_cols[i, r*n_pad + j] = A_r[i, j]
    adj = build_relation_adjacency(edge_index, edge_type, n, num_relations)
    a_aug = jnp.zeros((ra, n_pad, n_pad), jnp.float32)
    a_aug = a_aug.at[:num_relations, :n, :n].set(adj)
    a_aug = a_aug.at[num_relations].set(jnp.eye(n_pad, dtype=jnp.float32))
    a_cols = jnp.transpose(a_aug, (1, 0, 2)).reshape(n_pad, ra * n_pad)

    x_pad = jnp.zeros((n_pad, LANES), jnp.float32).at[:n, :c].set(x)
    bias_pad = jnp.zeros((1, LANES), jnp.float32).at[0, :c].set(bias)
    # Segment (pooling) matrix; padded-node columns stay zero.
    seg = jnp.zeros((g_pad, n_pad), jnp.float32).at[:, :n].set(
        jax.nn.one_hot(batch, g_pad, dtype=jnp.float32).T)

    vmem = lambda: pl.BlockSpec(memory_space=pltpu.MemorySpace.VMEM)
    gf_p, nf1_p, nf2_p = pl.pallas_call(
        _rgcn_fused_kernel,
        out_shape=(
            jax.ShapeDtypeStruct((g_pad, LANES), jnp.float32),   # pooled graph feats
            jax.ShapeDtypeStruct((n_pad, LANES), jnp.float32),   # nf1
            jax.ShapeDtypeStruct((n_pad, LANES), jnp.float32),   # nf2
        ),
        in_specs=[vmem(), vmem(), vmem(), vmem(), vmem()],
        out_specs=(vmem(), vmem(), vmem()),
        scratch_shapes=[pltpu.VMEM((ra * n_pad, LANES), jnp.float32)],  # Y stack
    )(x_pad, a_cols, w_pad, bias_pad, seg)

    # Strip channel / node / graph padding (wrapper-side layout glue).
    return gf_p[:num_graphs, :c], nf1_p[:n, :c], nf2_p[:n, :c]


# ----------------------------------------------------------------------------
# Pure-JAX reference (matches the PyTorch module semantics).
# ----------------------------------------------------------------------------
def rgcn_reference(x, edge_index, edge_type, batch, params, num_relations, num_graphs):
    weight_basis, comp, root, bias = params
    nb, c, _ = weight_basis.shape
    w = (comp @ weight_basis.reshape(nb, c * c)).reshape(num_relations, c, c)
    adj = build_relation_adjacency(edge_index, edge_type, x.shape[0], num_relations)

    def conv(h):
        out = h @ root + bias
        for r in range(num_relations):
            out = out + adj[r] @ (h @ w[r])
        return out

    nf1 = conv(x)
    nf2 = conv(jax.nn.relu(nf1))
    seg = jax.nn.one_hot(batch, num_graphs, dtype=jnp.float32).T
    return seg @ nf2, nf1, nf2


if __name__ == "__main__":
    key = jax.random.PRNGKey(0)
    N, C, R, E, G = 16, 32, 4, 48, 2     # nodes, channels, relations, edges, graphs
    kx, ke, kt, kp = jax.random.split(key, 4)

    x = jax.random.normal(kx, (N, C), jnp.float32)
    edge_index = jax.random.randint(ke, (2, E), 0, N, dtype=jnp.int32)
    edge_type = jax.random.randint(kt, (E,), 0, R, dtype=jnp.int32)
    batch = jnp.concatenate([jnp.zeros(N // 2, jnp.int32), jnp.ones(N // 2, jnp.int32)])

    params = init_params(kp, C, R, num_bases=30)
    gf, nf1, nf2 = rgcn_forward(x, edge_index, edge_type, batch, params, R, G)
    jax.block_until_ready((gf, nf1, nf2))

    gf_r, nf1_r, nf2_r = rgcn_reference(x, edge_index, edge_type, batch, params, R, G)
    assert gf.shape == (G, C) and nf1.shape == (N, C) and nf2.shape == (N, C)
    for got, ref in ((gf, gf_r), (nf1, nf1_r), (nf2, nf2_r)):
        assert bool(jnp.all(jnp.isfinite(got)))
        assert bool(jnp.allclose(got, ref, rtol=2e-2, atol=2e-2)), \
            float(jnp.max(jnp.abs(got - ref)))
    print("KERNEL_OK")
</pallas_src>

<mosaic_0001>
module attributes {stable_mosaic.version = 11 : i64} {
  func.func @_rgcn_fused_kernel(%arg0: memref<32x128xf32, #tpu.memory_space<vmem>>, %arg1: memref<32x160xf32, #tpu.memory_space<vmem>>, %arg2: memref<5x128x128xf32, #tpu.memory_space<vmem>>, %arg3: memref<1x128xf32, #tpu.memory_space<vmem>>, %arg4: memref<8x32xf32, #tpu.memory_space<vmem>>, %arg5: memref<8x128xf32, #tpu.memory_space<vmem>>, %arg6: memref<32x128xf32, #tpu.memory_space<vmem>>, %arg7: memref<32x128xf32, #tpu.memory_space<vmem>>, %arg8: memref<160x128xf32, #tpu.memory_space<vmem>>) attributes {dimension_semantics = [], scalar_prefetch = 0 : i64, scratch_operands = 1 : i64, tpu.core_type = #tpu.core_type<tc>} {
    %c0 = arith.constant 0 : index
    %c0_0 = arith.constant 0 : index
    %0 = vector.load %arg3[%c0, %c0_0] : memref<1x128xf32, #tpu.memory_space<vmem>>, vector<1x128xf32>
    %c0_1 = arith.constant 0 : index
    %c0_2 = arith.constant 0 : index
    %1 = vector.load %arg0[%c0_1, %c0_2] : memref<32x128xf32, #tpu.memory_space<vmem>>, vector<32x128xf32>
    %c0_3 = arith.constant 0 : index
    %c0_4 = arith.constant 0 : index
    %c0_5 = arith.constant 0 : index
    %2 = vector.load %arg2[%c0_3, %c0_4, %c0_5] : memref<5x128x128xf32, #tpu.memory_space<vmem>>, vector<1x128x128xf32>
    %3 = vector.shape_cast %2 : vector<1x128x128xf32> to vector<128x128xf32>
    %cst = arith.constant dense<0.000000e+00> : vector<32x128xf32>
    %4 = tpu.matmul %1, %3, %cst {dimension_numbers = #tpu.dot_dimension_numbers<[1], [0], [0], [1], [0, 0, 1, 1], [], []>} : vector<32x128xf32>, vector<128x128xf32>, vector<32x128xf32> -> vector<32x128xf32>
    %c0_6 = arith.constant 0 : index
    %c0_7 = arith.constant 0 : index
    %5 = vector.load %arg8[%c0_6, %c0_7] : memref<160x128xf32, #tpu.memory_space<vmem>>, vector<32x128xf32>
    tpu.vector_store %arg8[%c0_6, %c0_7], %4 {strides = array<i32>} : memref<160x128xf32, #tpu.memory_space<vmem>>, vector<32x128xf32>,
    %c1 = arith.constant 1 : index
    %c0_8 = arith.constant 0 : index
    %c0_9 = arith.constant 0 : index
    %6 = vector.load %arg2[%c1, %c0_8, %c0_9] : memref<5x128x128xf32, #tpu.memory_space<vmem>>, vector<1x128x128xf32>
    %7 = vector.shape_cast %6 : vector<1x128x128xf32> to vector<128x128xf32>
    %cst_10 = arith.constant dense<0.000000e+00> : vector<32x128xf32>
    %8 = tpu.matmul %1, %7, %cst_10 {dimension_numbers = #tpu.dot_dimension_numbers<[1], [0], [0], [1], [0, 0, 1, 1], [], []>} : vector<32x128xf32>, vector<128x128xf32>, vector<32x128xf32> -> vector<32x128xf32>
    %c32 = arith.constant 32 : index
    %c0_11 = arith.constant 0 : index
    %9 = vector.load %arg8[%c32, %c0_11] : memref<160x128xf32, #tpu.memory_space<vmem>>, vector<32x128xf32>
    tpu.vector_store %arg8[%c32, %c0_11], %8 {strides = array<i32>} : memref<160x128xf32, #tpu.memory_space<vmem>>, vector<32x128xf32>,
    %c2 = arith.constant 2 : index
    %c0_12 = arith.constant 0 : index
    %c0_13 = arith.constant 0 : index
    %10 = vector.load %arg2[%c2, %c0_12, %c0_13] : memref<5x128x128xf32, #tpu.memory_space<vmem>>, vector<1x128x128xf32>
    %11 = vector.shape_cast %10 : vector<1x128x128xf32> to vector<128x128xf32>
    %cst_14 = arith.constant dense<0.000000e+00> : vector<32x128xf32>
    %12 = tpu.matmul %1, %11, %cst_14 {dimension_numbers = #tpu.dot_dimension_numbers<[1], [0], [0], [1], [0, 0, 1, 1], [], []>} : vector<32x128xf32>, vector<128x128xf32>, vector<32x128xf32> -> vector<32x128xf32>
    %c64 = arith.constant 64 : index
    %c0_15 = arith.constant 0 : index
    %13 = vector.load %arg8[%c64, %c0_15] : memref<160x128xf32, #tpu.memory_space<vmem>>, vector<32x128xf32>
    tpu.vector_store %arg8[%c64, %c0_15], %12 {strides = array<i32>} : memref<160x128xf32, #tpu.memory_space<vmem>>, vector<32x128xf32>,
    %c3 = arith.constant 3 : index
    %c0_16 = arith.constant 0 : index
    %c0_17 = arith.constant 0 : index
    %14 = vector.load %arg2[%c3, %c0_16, %c0_17] : memref<5x128x128xf32, #tpu.memory_space<vmem>>, vector<1x128x128xf32>
    %15 = vector.shape_cast %14 : vector<1x128x128xf32> to vector<128x128xf32>
    %cst_18 = arith.constant dense<0.000000e+00> : vector<32x128xf32>
    %16 = tpu.matmul %1, %15, %cst_18 {dimension_numbers = #tpu.dot_dimension_numbers<[1], [0], [0], [1], [0, 0, 1, 1], [], []>} : vector<32x128xf32>, vector<128x128xf32>, vector<32x128xf32> -> vector<32x128xf32>
    %c96 = arith.constant 96 : index
    %c0_19 = arith.constant 0 : index
    %17 = vector.load %arg8[%c96, %c0_19] : memref<160x128xf32, #tpu.memory_space<vmem>>, vector<32x128xf32>
    tpu.vector_store %arg8[%c96, %c0_19], %16 {strides = array<i32>} : memref<160x128xf32, #tpu.memory_space<vmem>>, vector<32x128xf32>,
    %c4 = arith.constant 4 : index
    %c0_20 = arith.constant 0 : index
    %c0_21 = arith.constant 0 : index
    %18 = vector.load %arg2[%c4, %c0_20, %c0_21] : memref<5x128x128xf32, #tpu.memory_space<vmem>>, vector<1x128x128xf32>
    %19 = vector.shape_cast %18 : vector<1x128x128xf32> to vector<128x128xf32>
    %cst_22 = arith.constant dense<0.000000e+00> : vector<32x128xf32>
    %20 = tpu.matmul %1, %19, %cst_22 {dimension_numbers = #tpu.dot_dimension_numbers<[1], [0], [0], [1], [0, 0, 1, 1], [], []>} : vector<32x128xf32>, vector<128x128xf32>, vector<32x128xf32> -> vector<32x128xf32>
    %c128 = arith.constant 128 : index
    %c0_23 = arith.constant 0 : index
    %21 = vector.load %arg8[%c128, %c0_23] : memref<160x128xf32, #tpu.memory_space<vmem>>, vector<32x128xf32>
    tpu.vector_store %arg8[%c128, %c0_23], %20 {strides = array<i32>} : memref<160x128xf32, #tpu.memory_space<vmem>>, vector<32x128xf32>,
    %c0_24 = arith.constant 0 : index
    %c0_25 = arith.constant 0 : index
    %22 = vector.load %arg1[%c0_24, %c0_25] : memref<32x160xf32, #tpu.memory_space<vmem>>, vector<32x160xf32>
    %c0_26 = arith.constant 0 : index
    %c0_27 = arith.constant 0 : index
    %23 = vector.load %arg8[%c0_26, %c0_27] : memref<160x128xf32, #tpu.memory_space<vmem>>, vector<160x128xf32>
    %cst_28 = arith.constant dense<0.000000e+00> : vector<32x128xf32>
    %24 = tpu.matmul %22, %23, %cst_28 {dimension_numbers = #tpu.dot_dimension_numbers<[1], [0], [0], [1], [0, 0, 1, 1], [], []>} : vector<32x160xf32>, vector<160x128xf32>, vector<32x128xf32> -> vector<32x128xf32>
    %25 = vector.broadcast %0 : vector<1x128xf32> to vector<32x128xf32>
    %26 = arith.addf %24, %25 : vector<32x128xf32>
    %c0_29 = arith.constant 0 : index
    %c0_30 = arith.constant 0 : index
    %27 = vector.load %arg6[%c0_29, %c0_30] : memref<32x128xf32, #tpu.memory_space<vmem>>, vector<32x128xf32>
    tpu.vector_store %arg6[%c0_29, %c0_30], %26 {strides = array<i32>} : memref<32x128xf32, #tpu.memory_space<vmem>>, vector<32x128xf32>,
    %cst_31 = arith.constant 0.000000e+00 : f32
    %28 = vector.broadcast %cst_31 : f32 to vector<32x128xf32>
    %29 = arith.maximumf %26, %28 : vector<32x128xf32>
    %c0_32 = arith.constant 0 : index
    %c0_33 = arith.constant 0 : index
    %c0_34 = arith.constant 0 : index
    %30 = vector.load %arg2[%c0_32, %c0_33, %c0_34] : memref<5x128x128xf32, #tpu.memory_space<vmem>>, vector<1x128x128xf32>
    %31 = vector.shape_cast %30 : vector<1x128x128xf32> to vector<128x128xf32>
    %cst_35 = arith.constant dense<0.000000e+00> : vector<32x128xf32>
    %32 = tpu.matmul %29, %31, %cst_35 {dimension_numbers = #tpu.dot_dimension_numbers<[1], [0], [0], [1], [0, 0, 1, 1], [], []>} : vector<32x128xf32>, vector<128x128xf32>, vector<32x128xf32> -> vector<32x128xf32>
    %c0_36 = arith.constant 0 : index
    %c0_37 = arith.constant 0 : index
    %33 = vector.load %arg8[%c0_36, %c0_37] : memref<160x128xf32, #tpu.memory_space<vmem>>, vector<32x128xf32>
    tpu.vector_store %arg8[%c0_36, %c0_37], %32 {strides = array<i32>} : memref<160x128xf32, #tpu.memory_space<vmem>>, vector<32x128xf32>,
    %c1_38 = arith.constant 1 : index
    %c0_39 = arith.constant 0 : index
    %c0_40 = arith.constant 0 : index
    %34 = vector.load %arg2[%c1_38, %c0_39, %c0_40] : memref<5x128x128xf32, #tpu.memory_space<vmem>>, vector<1x128x128xf32>
    %35 = vector.shape_cast %34 : vector<1x128x128xf32> to vector<128x128xf32>
    %cst_41 = arith.constant dense<0.000000e+00> : vector<32x128xf32>
    %36 = tpu.matmul %29, %35, %cst_41 {dimension_numbers = #tpu.dot_dimension_numbers<[1], [0], [0], [1], [0, 0, 1, 1], [], []>} : vector<32x128xf32>, vector<128x128xf32>, vector<32x128xf32> -> vector<32x128xf32>
    %c32_42 = arith.constant 32 : index
    %c0_43 = arith.constant 0 : index
    %37 = vector.load %arg8[%c32_42, %c0_43] : memref<160x128xf32, #tpu.memory_space<vmem>>, vector<32x128xf32>
    tpu.vector_store %arg8[%c32_42, %c0_43], %36 {strides = array<i32>} : memref<160x128xf32, #tpu.memory_space<vmem>>, vector<32x128xf32>,
    %c2_44 = arith.constant 2 : index
    %c0_45 = arith.constant 0 : index
    %c0_46 = arith.constant 0 : index
    %38 = vector.load %arg2[%c2_44, %c0_45, %c0_46] : memref<5x128x128xf32, #tpu.memory_space<vmem>>, vector<1x128x128xf32>
    %39 = vector.shape_cast %38 : vector<1x128x128xf32> to vector<128x128xf32>
    %cst_47 = arith.constant dense<0.000000e+00> : vector<32x128xf32>
    %40 = tpu.matmul %29, %39, %cst_47 {dimension_numbers = #tpu.dot_dimension_numbers<[1], [0], [0], [1], [0, 0, 1, 1], [], []>} : vector<32x128xf32>, vector<128x128xf32>, vector<32x128xf32> -> vector<32x128xf32>
    %c64_48 = arith.constant 64 : index
    %c0_49 = arith.constant 0 : index
    %41 = vector.load %arg8[%c64_48, %c0_49] : memref<160x128xf32, #tpu.memory_space<vmem>>, vector<32x128xf32>
    tpu.vector_store %arg8[%c64_48, %c0_49], %40 {strides = array<i32>} : memref<160x128xf32, #tpu.memory_space<vmem>>, vector<32x128xf32>,
    %c3_50 = arith.constant 3 : index
    %c0_51 = arith.constant 0 : index
    %c0_52 = arith.constant 0 : index
    %42 = vector.load %arg2[%c3_50, %c0_51, %c0_52] : memref<5x128x128xf32, #tpu.memory_space<vmem>>, vector<1x128x128xf32>
    %43 = vector.shape_cast %42 : vector<1x128x128xf32> to vector<128x128xf32>
    %cst_53 = arith.constant dense<0.000000e+00> : vector<32x128xf32>
    %44 = tpu.matmul %29, %43, %cst_53 {dimension_numbers = #tpu.dot_dimension_numbers<[1], [0], [0], [1], [0, 0, 1, 1], [], []>} : vector<32x128xf32>, vector<128x128xf32>, vector<32x128xf32> -> vector<32x128xf32>
    %c96_54 = arith.constant 96 : index
    %c0_55 = arith.constant 0 : index
    %45 = vector.load %arg8[%c96_54, %c0_55] : memref<160x128xf32, #tpu.memory_space<vmem>>, vector<32x128xf32>
    tpu.vector_store %arg8[%c96_54, %c0_55], %44 {strides = array<i32>} : memref<160x128xf32, #tpu.memory_space<vmem>>, vector<32x128xf32>,
    %c4_56 = arith.constant 4 : index
    %c0_57 = arith.constant 0 : index
    %c0_58 = arith.constant 0 : index
    %46 = vector.load %arg2[%c4_56, %c0_57, %c0_58] : memref<5x128x128xf32, #tpu.memory_space<vmem>>, vector<1x128x128xf32>
    %47 = vector.shape_cast %46 : vector<1x128x128xf32> to vector<128x128xf32>
    %cst_59 = arith.constant dense<0.000000e+00> : vector<32x128xf32>
    %48 = tpu.matmul %29, %47, %cst_59 {dimension_numbers = #tpu.dot_dimension_numbers<[1], [0], [0], [1], [0, 0, 1, 1], [], []>} : vector<32x128xf32>, vector<128x128xf32>, vector<32x128xf32> -> vector<32x128xf32>
    %c128_60 = arith.constant 128 : index
    %c0_61 = arith.constant 0 : index
    %49 = vector.load %arg8[%c128_60, %c0_61] : memref<160x128xf32, #tpu.memory_space<vmem>>, vector<32x128xf32>
    tpu.vector_store %arg8[%c128_60, %c0_61], %48 {strides = array<i32>} : memref<160x128xf32, #tpu.memory_space<vmem>>, vector<32x128xf32>,
    %c0_62 = arith.constant 0 : index
    %c0_63 = arith.constant 0 : index
    %50 = vector.load %arg1[%c0_62, %c0_63] : memref<32x160xf32, #tpu.memory_space<vmem>>, vector<32x160xf32>
    %c0_64 = arith.constant 0 : index
    %c0_65 = arith.constant 0 : index
    %51 = vector.load %arg8[%c0_64, %c0_65] : memref<160x128xf32, #tpu.memory_space<vmem>>, vector<160x128xf32>
    %cst_66 = arith.constant dense<0.000000e+00> : vector<32x128xf32>
    %52 = tpu.matmul %50, %51, %cst_66 {dimension_numbers = #tpu.dot_dimension_numbers<[1], [0], [0], [1], [0, 0, 1, 1], [], []>} : vector<32x160xf32>, vector<160x128xf32>, vector<32x128xf32> -> vector<32x128xf32>
    %53 = vector.broadcast %0 : vector<1x128xf32> to vector<32x128xf32>
    %54 = arith.addf %52, %53 : vector<32x128xf32>
    %c0_67 = arith.constant 0 : index
    %c0_68 = arith.constant 0 : index
    %55 = vector.load %arg7[%c0_67, %c0_68] : memref<32x128xf32, #tpu.memory_space<vmem>>, vector<32x128xf32>
    tpu.vector_store %arg7[%c0_67, %c0_68], %54 {strides = array<i32>} : memref<32x128xf32, #tpu.memory_space<vmem>>, vector<32x128xf32>,
    %c0_69 = arith.constant 0 : index
    %c0_70 = arith.constant 0 : index
    %56 = vector.load %arg4[%c0_69, %c0_70] : memref<8x32xf32, #tpu.memory_space<vmem>>, vector<8x32xf32>
    %cst_71 = arith.constant dense<0.000000e+00> : vector<8x128xf32>
    %57 = tpu.matmul %56, %54, %cst_71 {dimension_numbers = #tpu.dot_dimension_numbers<[1], [0], [0], [1], [0, 0, 1, 1], [], []>} : vector<8x32xf32>, vector<32x128xf32>, vector<8x128xf32> -> vector<8x128xf32>
    %c0_72 = arith.constant 0 : index
    %c0_73 = arith.constant 0 : index
    %58 = vector.load %arg5[%c0_72, %c0_73] : memref<8x128xf32, #tpu.memory_space<vmem>>, vector<8x128xf32>
    tpu.vector_store %arg5[%c0_72, %c0_73], %57 {strides = array<i32>} : memref<8x128xf32, #tpu.memory_space<vmem>>, vector<8x128xf32>,
    return
  }
}

</mosaic_0001>

<llo_original>
// kernel: tpu_custom_call.1
$region0: #{tpu_custom_call.1}
  #allocation0 [shape = 'u32[]', space=smem, size = 0x4, offset = 0x4, fixed_abs, tag = 'smem constant byte address 0x4 - core index']
  #allocation1 [shape = 'u32[144,128]{1,0:T(1,128)}', space=vmem, size = 0x12000, scoped, tag = 'internal scratch']
  #allocation2 [shape = 'f32[160,128]{1,0:T(8,128)}', space=vmem, size = 0x14000, scoped, tag = 'scratch operand']
  %s0 = inlined_call_operand.hbm [shape: f32[32,128], index: 0, kind: input, shape index: {}]
  %s1 = inlined_call_operand.hbm [shape: f32[32,160], index: 1, kind: input, shape index: {}]
  %s2 = inlined_call_operand.hbm [shape: f32[5,128,128], index: 2, kind: input, shape index: {}]
  %s3 = inlined_call_operand.vmem [shape: f32[1,128], index: 3, kind: input, shape index: {}]
  %s4 = inlined_call_operand.vmem [shape: f32[8,32], index: 4, kind: input, shape index: {}]
  %s5 = inlined_call_operand.hbm [shape: f32[8,128], index: 5, kind: output, shape index: {0}]
  %s6 = inlined_call_operand.hbm [shape: f32[32,128], index: 6, kind: output, shape index: {1}]
  %s7 = inlined_call_operand.hbm [shape: f32[32,128], index: 7, kind: output, shape index: {2}]
  %8 = xla_tuple %s5, %s6, %s7
  %s9 = sld [smem:[#allocation0]]
  $region58: #{tpu_custom_call.1} parent=0
    _
  %s11 = ssub.s32 1, %s9
  %s12 = scalar_select 0, %s11, %s9
  $region1: #{tpu_custom_call.1} parent=0
    #allocation3 [shape = 'u8[16384]{0}', space=vmem, size = 0x4000, scoped, tag = 'input window, operand 0, single buffered']
    #allocation4 [shape = 's32[1]{0}', space=sflag, size = 0x4, scoped, tag = 'scoped memory for tpu_custom_call.1']
    #allocation5 [shape = 's32[1]{0}', space=sflag, size = 0x4, scoped, tag = 'scoped memory for tpu_custom_call.1']
    #allocation6 [shape = 'u8[32768]{0}', space=vmem, size = 0x8000, scoped, tag = 'input window, operand 1, single buffered']
    #allocation7 [shape = 's32[1]{0}', space=sflag, size = 0x4, scoped, tag = 'scoped memory for tpu_custom_call.1']
    #allocation8 [shape = 'u8[327680]{0}', space=vmem, size = 0x50000, scoped, tag = 'input window, operand 2, single buffered']
    #allocation9 [shape = 'u8[4096]{0}', space=vmem, size = 0x1000, scoped, tag = 'output window, operand 0, single buffered']
    #allocation10 [shape = 'u8[16384]{0}', space=vmem, size = 0x4000, scoped, tag = 'output window, operand 1, single buffered']
    #allocation11 [shape = 's32[1]{0}', space=sflag, size = 0x4, scoped, tag = 'scoped memory for tpu_custom_call.1']
    #allocation12 [shape = 'u8[16384]{0}', space=vmem, size = 0x4000, scoped, tag = 'output window, operand 2, single buffered']
    %13 = vsyncpa [#allocation4], 0
    %14 = vsyncpa [#allocation7], 0
    %15 = vsyncpa [#allocation5], 0
    %16 = vsyncpa [#allocation11], 0
    // Predicated region
    $region2: #{tpu_custom_call.1} parent=1 // pred_check
      _
    $region3: #{tpu_custom_call.1} parent=1 // pred_check_branch
      %18 = sbr.rel (0) target = $region5
    $region4: #{tpu_custom_call.1} parent=1 // pred_region
      %s20 = ssub.s32 512, 512
      %21 = vsyncadd [#allocation4], %s20
      %s22 = sshll.u32 [#allocation3], 4
      %s23 = int_to_ptr.vmem [resolvable:$true] %s22
      %28 = dma.hbm_to_vmem [thread:$0]  %s0, 512, %s23, [#allocation4], 128, 128, 8
    $region5: #{tpu_custom_call.1} parent=1 // pred_fallthru
      _
    // Predicated region
    $region6: #{tpu_custom_call.1} parent=1 // pred_check
      _
    $region7: #{tpu_custom_call.1} parent=1 // pred_check_branch
      %30 = sbr.rel (0) target = $region9
    $region8: #{tpu_custom_call.1} parent=1 // pred_region
      %s32 = ssub.s32 1024, 1024
      %33 = vsyncadd [#allocation7], %s32
      %s34 = sshll.u32 [#allocation6], 4
      %s35 = int_to_ptr.vmem [resolvable:$true] %s34
      %40 = dma.hbm_to_vmem [thread:$0]  %s1, 1024, %s35, [#allocation7], 256, 256, 16
    $region9: #{tpu_custom_call.1} parent=1 // pred_fallthru
      _
    // Predicated region
    $region10: #{tpu_custom_call.1} parent=1 // pred_check
      _
    $region11: #{tpu_custom_call.1} parent=1 // pred_check_branch
      %42 = sbr.rel (0) target = $region13
    $region12: #{tpu_custom_call.1} parent=1 // pred_region
      %s44 = ssub.s32 10240, 10240
      %45 = vsyncadd [#allocation7], %s44
      %s46 = sshll.u32 [#allocation8], 4
      %s47 = int_to_ptr.vmem [resolvable:$true] %s46
      %52 = dma.hbm_to_vmem [thread:$0]  %s2, 10240, %s47, [#allocation7], 128, 128, 8
    $region13: #{tpu_custom_call.1} parent=1 // pred_fallthru
      _
    // Predicated region
    $region14: #{tpu_custom_call.1} parent=1 // pred_check
      _
    $region15: #{tpu_custom_call.1} parent=1 // pred_check_branch
      %54 = sbr.rel (0) target = $region17
    $region16: #{tpu_custom_call.1} parent=1 // pred_region
      _
    $region17: #{tpu_custom_call.1} parent=1 // pred_fallthru
      _
    // Predicated region
    $region18: #{tpu_custom_call.1} parent=1 // pred_check
      _
    $region19: #{tpu_custom_call.1} parent=1 // pred_check_branch
      %56 = sbr.rel (0) target = $region21
    $region20: #{tpu_custom_call.1} parent=1 // pred_region
      _
    $region21: #{tpu_custom_call.1} parent=1 // pred_fallthru
      _
    // Predicated region
    $region22: #{tpu_custom_call.1} parent=1 // pred_check
      _
    $region23: #{tpu_custom_call.1} parent=1 // pred_check_branch
      %58 = sbr.rel (0) target = $region25
    $region24: #{tpu_custom_call.1} parent=1 // pred_region
      %59 = dma.done [#allocation4], 512
    $region25: #{tpu_custom_call.1} parent=1 // pred_fallthru
      _
    // Predicated region
    $region26: #{tpu_custom_call.1} parent=1 // pred_check
      _
    $region27: #{tpu_custom_call.1} parent=1 // pred_check_branch
      %61 = sbr.rel (0) target = $region29
    $region28: #{tpu_custom_call.1} parent=1 // pred_region
      %62 = dma.done [#allocation7], 1024
    $region29: #{tpu_custom_call.1} parent=1 // pred_fallthru
      _
    // Predicated region
    $region30: #{tpu_custom_call.1} parent=1 // pred_check
      _
    $region31: #{tpu_custom_call.1} parent=1 // pred_check_branch
      %64 = sbr.rel (0) target = $region33
    $region32: #{tpu_custom_call.1} parent=1 // pred_region
      %65 = dma.done [#allocation7], 10240
    $region33: #{tpu_custom_call.1} parent=1 // pred_fallthru
      _
    %v66 = vld [vmem:[%s3] sm:$0x1]
    %v67 = vld [vmem:[#allocation3] sm:$0xff]
    %v68 = vld [vmem:[#allocation3 + $0x8] sm:$0xff]
    %v69 = vld [vmem:[#allocation3 + $0x10] sm:$0xff]
    %v70 = vld [vmem:[#allocation3 + $0x18] sm:$0xff]
    %v71 = vld [vmem:[#allocation8] sm:$0xff]
    %v72 = vld [vmem:[#allocation8 + $0x8] sm:$0xff]
    %v73 = vld [vmem:[#allocation8 + $0x10] sm:$0xff]
    %v74 = vld [vmem:[#allocation8 + $0x18] sm:$0xff]
    %v75 = vld [vmem:[#allocation8 + $0x20] sm:$0xff]
    %v76 = vld [vmem:[#allocation8 + $0x28] sm:$0xff]
    %v77 = vld [vmem:[#allocation8 + $0x30] sm:$0xff]
    %v78 = vld [vmem:[#allocation8 + $0x38] sm:$0xff]
    %v79 = vld [vmem:[#allocation8 + $0x40] sm:$0xff]
    %v80 = vld [vmem:[#allocation8 + $0x48] sm:$0xff]
    %v81 = vld [vmem:[#allocation8 + $0x50] sm:$0xff]
    %v82 = vld [vmem:[#allocation8 + $0x58] sm:$0xff]
    %v83 = vld [vmem:[#allocation8 + $0x60] sm:$0xff]
    %v84 = vld [vmem:[#allocation8 + $0x68] sm:$0xff]
    %v85 = vld [vmem:[#allocation8 + $0x70] sm:$0xff]
    %v86 = vld [vmem:[#allocation8 + $0x78] sm:$0xff]
    %87 = vmatprep.subr.mxu0 0.0
    %88 = vmatpush1.msra.mxu0 %v71
    %89 = vmatprep.subr.mxu0 0.0
    %90 = vmatpush1.msra.mxu0 %v72
    %91 = vmatprep.subr.mxu0 0.0
    %92 = vmatpush1.msra.mxu0 %v73
    %93 = vmatprep.subr.mxu0 0.0
    %94 = vmatpush1.msra.mxu0 %v74
    %95 = vmatprep.subr.mxu0 0.0
    %96 = vmatpush1.msra.mxu0 %v75
    %97 = vmatprep.subr.mxu0 0.0
    %98 = vmatpush1.msra.mxu0 %v76
    %99 = vmatprep.subr.mxu0 0.0
    %100 = vmatpush1.msra.mxu0 %v77
    %101 = vmatprep.subr.mxu0 0.0
    %102 = vmatpush1.msra.mxu0 %v78
    %103 = vmatprep.subr.mxu0 0.0
    %104 = vmatpush1.msra.mxu0 %v79
    %105 = vmatprep.subr.mxu0 0.0
    %106 = vmatpush1.msra.mxu0 %v80
    %107 = vmatprep.subr.mxu0 0.0
    %108 = vmatpush1.msra.mxu0 %v81
    %109 = vmatprep.subr.mxu0 0.0
    %110 = vmatpush1.msra.mxu0 %v82
    %111 = vmatprep.subr.mxu0 0.0
    %112 = vmatpush1.msra.mxu0 %v83
    %113 = vmatprep.subr.mxu0 0.0
    %114 = vmatpush1.msra.mxu0 %v84
    %115 = vmatprep.subr.mxu0 0.0
    %116 = vmatpush1.msra.mxu0 %v85
    %117 = vmatprep.subr.mxu0 0.0
    %118 = vmatpush1.msra.mxu0 %v86
    %119 = vmatprep.subr.mxu0 0.0
    %120 = vmatpush1.msra.mxu0 0.0
    %121 = vmatprep.subr.mxu0 0.0
    %122 = vmatpush1.msra.mxu0 0.0
    %123 = vmatprep.subr.mxu0 0.0
    %124 = vmatpush1.msra.mxu0 0.0
    %125 = vmatprep.subr.mxu0 0.0
    %126 = vmatpush1.msra.mxu0 0.0
    %127 = vmatprep.subr.mxu0 0.0
    %128 = vmatpush1.msra.mxu0 0.0
    %129 = vmatprep.subr.mxu0 0.0
    %130 = vmatpush1.msra.mxu0 0.0
    %131 = vmatprep.subr.mxu0 0.0
    %132 = vmatpush1.msra.mxu0 0.0
    %133 = vmatprep.subr.mxu0 0.0
    %134 = vmatpush1.msra.mxu0 0.0
    %135 = vmatprep.subr.mxu0 0.0
    %136 = vmatpush1.msra.mxu0 0.0
    %137 = vmatprep.subr.mxu0 0.0
    %138 = vmatpush1.msra.mxu0 0.0
    %139 = vmatprep.subr.mxu0 0.0
    %140 = vmatpush1.msra.mxu0 0.0
    %141 = vmatprep.subr.mxu0 0.0
    %142 = vmatpush1.msra.mxu0 0.0
    %143 = vmatprep.subr.mxu0 0.0
    %144 = vmatpush1.msra.mxu0 0.0
    %145 = vmatprep.subr.mxu0 0.0
    %146 = vmatpush1.msra.mxu0 0.0
    %147 = vmatprep.subr.mxu0 0.0
    %148 = vmatpush1.msra.mxu0 0.0
    %149 = vmatprep.subr.mxu0 0.0
    %150 = vmatpush1.msra.mxu0 0.0
    %151 = vmatprep.mubr.f32.mxu0 0.0
    %152 = vmatmul.mubr.f32.gmra.mrb[0].mxu0 %v67
    %v153 = vpop.f32.mrb[0].mxu0
    %v154 = vadd.f32 0.0, %v153
    %v155 = vpop.f32.mrb[0].mxu0
    %156 = vmatprep.mubr.f32.mxu0 0.0
    %157 = vmatmul.mubr.f32.gmra.mrb[0].mxu0 %v68
    %v158 = vpop.f32.mrb[0].mxu0
    %v159 = vadd.f32 0.0, %v158
    %v160 = vpop.f32.mrb[0].mxu0
    %161 = vmatprep.mubr.f32.mxu0 0.0
    %162 = vmatmul.mubr.f32.gmra.mrb[0].mxu0 %v69
    %v163 = vpop.f32.mrb[0].mxu0
    %v164 = vadd.f32 0.0, %v163
    %v165 = vpop.f32.mrb[0].mxu0
    %166 = vmatprep.mubr.f32.mxu0 0.0
    %167 = vmatmul.mubr.f32.gmra.mrb[0].mxu0 %v70
    %v168 = vpop.f32.mrb[0].mxu0
    %v169 = vadd.f32 0.0, %v168
    %v170 = vpop.f32.mrb[0].mxu0
    %171 = vdwg.mxu0
    %172 = vst [vmem:[#allocation2] sm:$0xff] %v154
    %173 = vst [vmem:[#allocation2 + $0x8] sm:$0xff] %v159
    %174 = vst [vmem:[#allocation2 + $0x10] sm:$0xff] %v164
    %175 = vst [vmem:[#allocation2 + $0x18] sm:$0xff] %v169
    %s176 = scalar_lea.vmem [#allocation8], 128
    %v177 = vld [vmem:[%s176] sm:$0xff]
    %v178 = vld [vmem:[%s176 + $0x8] sm:$0xff]
    %v179 = vld [vmem:[%s176 + $0x10] sm:$0xff]
    %v180 = vld [vmem:[%s176 + $0x18] sm:$0xff]
    %v181 = vld [vmem:[%s176 + $0x20] sm:$0xff]
    %v182 = vld [vmem:[%s176 + $0x28] sm:$0xff]
    %v183 = vld [vmem:[%s176 + $0x30] sm:$0xff]
    %v184 = vld [vmem:[%s176 + $0x38] sm:$0xff]
    %v185 = vld [vmem:[%s176 + $0x40] sm:$0xff]
    %v186 = vld [vmem:[%s176 + $0x48] sm:$0xff]
    %v187 = vld [vmem:[%s176 + $0x50] sm:$0xff]
    %v188 = vld [vmem:[%s176 + $0x58] sm:$0xff]
    %v189 = vld [vmem:[%s176 + $0x60] sm:$0xff]
    %v190 = vld [vmem:[%s176 + $0x68] sm:$0xff]
    %v191 = vld [vmem:[%s176 + $0x70] sm:$0xff]
    %v192 = vld [vmem:[%s176 + $0x78] sm:$0xff]
    %193 = vmatprep.subr.mxu0 0.0
    %194 = vmatpush1.msra.mxu0 %v177
    %195 = vmatprep.subr.mxu0 0.0
    %196 = vmatpush1.msra.mxu0 %v178
    %197 = vmatprep.subr.mxu0 0.0
    %198 = vmatpush1.msra.mxu0 %v179
    %199 = vmatprep.subr.mxu0 0.0
    %200 = vmatpush1.msra.mxu0 %v180
    %201 = vmatprep.subr.mxu0 0.0
    %202 = vmatpush1.msra.mxu0 %v181
    %203 = vmatprep.subr.mxu0 0.0
    %204 = vmatpush1.msra.mxu0 %v182
    %205 = vmatprep.subr.mxu0 0.0
    %206 = vmatpush1.msra.mxu0 %v183
    %207 = vmatprep.subr.mxu0 0.0
    %208 = vmatpush1.msra.mxu0 %v184
    %209 = vmatprep.subr.mxu0 0.0
    %210 = vmatpush1.msra.mxu0 %v185
    %211 = vmatprep.subr.mxu0 0.0
    %212 = vmatpush1.msra.mxu0 %v186
    %213 = vmatprep.subr.mxu0 0.0
    %214 = vmatpush1.msra.mxu0 %v187
    %215 = vmatprep.subr.mxu0 0.0
    %216 = vmatpush1.msra.mxu0 %v188
    %217 = vmatprep.subr.mxu0 0.0
    %218 = vmatpush1.msra.mxu0 %v189
    %219 = vmatprep.subr.mxu0 0.0
    %220 = vmatpush1.msra.mxu0 %v190
    %221 = vmatprep.subr.mxu0 0.0
    %222 = vmatpush1.msra.mxu0 %v191
    %223 = vmatprep.subr.mxu0 0.0
    %224 = vmatpush1.msra.mxu0 %v192
    %225 = vmatprep.subr.mxu0 0.0
    %226 = vmatpush1.msra.mxu0 0.0
    %227 = vmatprep.subr.mxu0 0.0
    %228 = vmatpush1.msra.mxu0 0.0
    %229 = vmatprep.subr.mxu0 0.0
    %230 = vmatpush1.msra.mxu0 0.0
    %231 = vmatprep.subr.mxu0 0.0
    %232 = vmatpush1.msra.mxu0 0.0
    %233 = vmatprep.subr.mxu0 0.0
    %234 = vmatpush1.msra.mxu0 0.0
    %235 = vmatprep.subr.mxu0 0.0
    %236 = vmatpush1.msra.mxu0 0.0
    %237 = vmatprep.subr.mxu0 0.0
    %238 = vmatpush1.msra.mxu0 0.0
    %239 = vmatprep.subr.mxu0 0.0
    %240 = vmatpush1.msra.mxu0 0.0
    %241 = vmatprep.subr.mxu0 0.0
    %242 = vmatpush1.msra.mxu0 0.0
    %243 = vmatprep.subr.mxu0 0.0
    %244 = vmatpush1.msra.mxu0 0.0
    %245 = vmatprep.subr.mxu0 0.0
    %246 = vmatpush1.msra.mxu0 0.0
    %247 = vmatprep.subr.mxu0 0.0
    %248 = vmatpush1.msra.mxu0 0.0
    %249 = vmatprep.subr.mxu0 0.0
    %250 = vmatpush1.msra.mxu0 0.0
    %251 = vmatprep.subr.mxu0 0.0
    %252 = vmatpush1.msra.mxu0 0.0
    %253 = vmatprep.subr.mxu0 0.0
    %254 = vmatpush1.msra.mxu0 0.0
    %255 = vmatprep.subr.mxu0 0.0
    %256 = vmatpush1.msra.mxu0 0.0
    %257 = vmatprep.mubr.f32.mxu0 0.0
    %258 = vmatmul.mubr.f32.gmra.mrb[0].mxu0 %v67
    %v259 = vpop.f32.mrb[0].mxu0
    %v260 = vadd.f32 0.0, %v259
    %v261 = vpop.f32.mrb[0].mxu0
    %262 = vmatprep.mubr.f32.mxu0 0.0
    %263 = vmatmul.mubr.f32.gmra.mrb[0].mxu0 %v68
    %v264 = vpop.f32.mrb[0].mxu0
    %v265 = vadd.f32 0.0, %v264
    %v266 = vpop.f32.mrb[0].mxu0
    %267 = vmatprep.mubr.f32.mxu0 0.0
    %268 = vmatmul.mubr.f32.gmra.mrb[0].mxu0 %v69
    %v269 = vpop.f32.mrb[0].mxu0
    %v270 = vadd.f32 0.0, %v269
    %v271 = vpop.f32.mrb[0].mxu0
    %272 = vmatprep.mubr.f32.mxu0 0.0
    %273 = vmatmul.mubr.f32.gmra.mrb[0].mxu0 %v70
    %v274 = vpop.f32.mrb[0].mxu0
    %v275 = vadd.f32 0.0, %v274
    %v276 = vpop.f32.mrb[0].mxu0
    %277 = vdwg.mxu0
    %278 = vst [vmem:[#allocation2 + $0x20] sm:$0xff] %v260
    %279 = vst [vmem:[#allocation2 + $0x28] sm:$0xff] %v265
    %280 = vst [vmem:[#allocation2 + $0x30] sm:$0xff] %v270
    %281 = vst [vmem:[#allocation2 + $0x38] sm:$0xff] %v275
    %s282 = scalar_lea.vmem [#allocation8], 256
    %v283 = vld [vmem:[%s282] sm:$0xff]
    %v284 = vld [vmem:[%s282 + $0x8] sm:$0xff]
    %v285 = vld [vmem:[%s282 + $0x10] sm:$0xff]
    %v286 = vld [vmem:[%s282 + $0x18] sm:$0xff]
    %v287 = vld [vmem:[%s282 + $0x20] sm:$0xff]
    %v288 = vld [vmem:[%s282 + $0x28] sm:$0xff]
    %v289 = vld [vmem:[%s282 + $0x30] sm:$0xff]
    %v290 = vld [vmem:[%s282 + $0x38] sm:$0xff]
    %v291 = vld [vmem:[%s282 + $0x40] sm:$0xff]
    %v292 = vld [vmem:[%s282 + $0x48] sm:$0xff]
    %v293 = vld [vmem:[%s282 + $0x50] sm:$0xff]
    %v294 = vld [vmem:[%s282 + $0x58] sm:$0xff]
    %v295 = vld [vmem:[%s282 + $0x60] sm:$0xff]
    %v296 = vld [vmem:[%s282 + $0x68] sm:$0xff]
    %v297 = vld [vmem:[%s282 + $0x70] sm:$0xff]
    %v298 = vld [vmem:[%s282 + $0x78] sm:$0xff]
    %299 = vmatprep.subr.mxu0 0.0
    %300 = vmatpush1.msra.mxu0 %v283
    %301 = vmatprep.subr.mxu0 0.0
    %302 = vmatpush1.msra.mxu0 %v284
    %303 = vmatprep.subr.mxu0 0.0
    %304 = vmatpush1.msra.mxu0 %v285
    %305 = vmatprep.subr.mxu0 0.0
    %306 = vmatpush1.msra.mxu0 %v286
    %307 = vmatprep.subr.mxu0 0.0
    %308 = vmatpush1.msra.mxu0 %v287
    %309 = vmatprep.subr.mxu0 0.0
    %310 = vmatpush1.msra.mxu0 %v288
    %311 = vmatprep.subr.mxu0 0.0
    %312 = vmatpush1.msra.mxu0 %v289
    %313 = vmatprep.subr.mxu0 0.0
    %314 = vmatpush1.msra.mxu0 %v290
    %315 = vmatprep.subr.mxu0 0.0
    %316 = vmatpush1.msra.mxu0 %v291
    %317 = vmatprep.subr.mxu0 0.0
    %318 = vmatpush1.msra.mxu0 %v292
    %319 = vmatprep.subr.mxu0 0.0
    %320 = vmatpush1.msra.mxu0 %v293
    %321 = vmatprep.subr.mxu0 0.0
    %322 = vmatpush1.msra.mxu0 %v294
    %323 = vmatprep.subr.mxu0 0.0
    %324 = vmatpush1.msra.mxu0 %v295
    %325 = vmatprep.subr.mxu0 0.0
    %326 = vmatpush1.msra.mxu0 %v296
    %327 = vmatprep.subr.mxu0 0.0
    %328 = vmatpush1.msra.mxu0 %v297
    %329 = vmatprep.subr.mxu0 0.0
    %330 = vmatpush1.msra.mxu0 %v298
    %331 = vmatprep.subr.mxu0 0.0
    %332 = vmatpush1.msra.mxu0 0.0
    %333 = vmatprep.subr.mxu0 0.0
    %334 = vmatpush1.msra.mxu0 0.0
    %335 = vmatprep.subr.mxu0 0.0
    %336 = vmatpush1.msra.mxu0 0.0
    %337 = vmatprep.subr.mxu0 0.0
    %338 = vmatpush1.msra.mxu0 0.0
    %339 = vmatprep.subr.mxu0 0.0
    %340 = vmatpush1.msra.mxu0 0.0
    %341 = vmatprep.subr.mxu0 0.0
    %342 = vmatpush1.msra.mxu0 0.0
    %343 = vmatprep.subr.mxu0 0.0
    %344 = vmatpush1.msra.mxu0 0.0
    %345 = vmatprep.subr.mxu0 0.0
    %346 = vmatpush1.msra.mxu0 0.0
    %347 = vmatprep.subr.mxu0 0.0
    %348 = vmatpush1.msra.mxu0 0.0
    %349 = vmatprep.subr.mxu0 0.0
    %350 = vmatpush1.msra.mxu0 0.0
    %351 = vmatprep.subr.mxu0 0.0
    %352 = vmatpush1.msra.mxu0 0.0
    %353 = vmatprep.subr.mxu0 0.0
    %354 = vmatpush1.msra.mxu0 0.0
    %355 = vmatprep.subr.mxu0 0.0
    %356 = vmatpush1.msra.mxu0 0.0
    %357 = vmatprep.subr.mxu0 0.0
    %358 = vmatpush1.msra.mxu0 0.0
    %359 = vmatprep.subr.mxu0 0.0
    %360 = vmatpush1.msra.mxu0 0.0
    %361 = vmatprep.subr.mxu0 0.0
    %362 = vmatpush1.msra.mxu0 0.0
    %363 = vmatprep.mubr.f32.mxu0 0.0
    %364 = vmatmul.mubr.f32.gmra.mrb[0].mxu0 %v67
    %v365 = vpop.f32.mrb[0].mxu0
    %v366 = vadd.f32 0.0, %v365
    %v367 = vpop.f32.mrb[0].mxu0
    %368 = vmatprep.mubr.f32.mxu0 0.0
    %369 = vmatmul.mubr.f32.gmra.mrb[0].mxu0 %v68
    %v370 = vpop.f32.mrb[0].mxu0
    %v371 = vadd.f32 0.0, %v370
    %v372 = vpop.f32.mrb[0].mxu0
    %373 = vmatprep.mubr.f32.mxu0 0.0
    %374 = vmatmul.mubr.f32.gmra.mrb[0].mxu0 %v69
    %v375 = vpop.f32.mrb[0].mxu0
    %v376 = vadd.f32 0.0, %v375
    %v377 = vpop.f32.mrb[0].mxu0
    %378 = vmatprep.mubr.f32.mxu0 0.0
    %379 = vmatmul.mubr.f32.gmra.mrb[0].mxu0 %v70
    %v380 = vpop.f32.mrb[0].mxu0
    %v381 = vadd.f32 0.0, %v380
    %v382 = vpop.f32.mrb[0].mxu0
    %383 = vdwg.mxu0
    %384 = vst [vmem:[#allocation2 + $0x40] sm:$0xff] %v366
    %385 = vst [vmem:[#allocation2 + $0x48] sm:$0xff] %v371
    %386 = vst [vmem:[#allocation2 + $0x50] sm:$0xff] %v376
    %387 = vst [vmem:[#allocation2 + $0x58] sm:$0xff] %v381
    %s388 = scalar_lea.vmem [#allocation8], 384
    %v389 = vld [vmem:[%s388] sm:$0xff]
    %v390 = vld [vmem:[%s388 + $0x8] sm:$0xff]
    %v391 = vld [vmem:[%s388 + $0x10] sm:$0xff]
    %v392 = vld [vmem:[%s388 + $0x18] sm:$0xff]
    %v393 = vld [vmem:[%s388 + $0x20] sm:$0xff]
    %v394 = vld [vmem:[%s388 + $0x28] sm:$0xff]
    %v395 = vld [vmem:[%s388 + $0x30] sm:$0xff]
    %v396 = vld [vmem:[%s388 + $0x38] sm:$0xff]
    %v397 = vld [vmem:[%s388 + $0x40] sm:$0xff]
    %v398 = vld [vmem:[%s388 + $0x48] sm:$0xff]
    %v399 = vld [vmem:[%s388 + $0x50] sm:$0xff]
    %v400 = vld [vmem:[%s388 + $0x58] sm:$0xff]
    %v401 = vld [vmem:[%s388 + $0x60] sm:$0xff]
    %v402 = vld [vmem:[%s388 + $0x68] sm:$0xff]
    %v403 = vld [vmem:[%s388 + $0x70] sm:$0xff]
    %v404 = vld [vmem:[%s388 + $0x78] sm:$0xff]
    %405 = vmatprep.subr.mxu0 0.0
    %406 = vmatpush1.msra.mxu0 %v389
    %407 = vmatprep.subr.mxu0 0.0
    %408 = vmatpush1.msra.mxu0 %v390
    %409 = vmatprep.subr.mxu0 0.0
    %410 = vmatpush1.msra.mxu0 %v391
    %411 = vmatprep.subr.mxu0 0.0
    %412 = vmatpush1.msra.mxu0 %v392
    %413 = vmatprep.subr.mxu0 0.0
    %414 = vmatpush1.msra.mxu0 %v393
    %415 = vmatprep.subr.mxu0 0.0
    %416 = vmatpush1.msra.mxu0 %v394
    %417 = vmatprep.subr.mxu0 0.0
    %418 = vmatpush1.msra.mxu0 %v395
    %419 = vmatprep.subr.mxu0 0.0
    %420 = vmatpush1.msra.mxu0 %v396
    %421 = vmatprep.subr.mxu0 0.0
    %422 = vmatpush1.msra.mxu0 %v397
    %423 = vmatprep.subr.mxu0 0.0
    %424 = vmatpush1.msra.mxu0 %v398
    %425 = vmatprep.subr.mxu0 0.0
    %426 = vmatpush1.msra.mxu0 %v399
    %427 = vmatprep.subr.mxu0 0.0
    %428 = vmatpush1.msra.mxu0 %v400
    %429 = vmatprep.subr.mxu0 0.0
    %430 = vmatpush1.msra.mxu0 %v401
    %431 = vmatprep.subr.mxu0 0.0
    %432 = vmatpush1.msra.mxu0 %v402
    %433 = vmatprep.subr.mxu0 0.0
    %434 = vmatpush1.msra.mxu0 %v403
    %435 = vmatprep.subr.mxu0 0.0
    %436 = vmatpush1.msra.mxu0 %v404
    %437 = vmatprep.subr.mxu0 0.0
    %438 = vmatpush1.msra.mxu0 0.0
    %439 = vmatprep.subr.mxu0 0.0
    %440 = vmatpush1.msra.mxu0 0.0
    %441 = vmatprep.subr.mxu0 0.0
    %442 = vmatpush1.msra.mxu0 0.0
    %443 = vmatprep.subr.mxu0 0.0
    %444 = vmatpush1.msra.mxu0 0.0
    %445 = vmatprep.subr.mxu0 0.0
    %446 = vmatpush1.msra.mxu0 0.0
    %447 = vmatprep.subr.mxu0 0.0
    %448 = vmatpush1.msra.mxu0 0.0
    %449 = vmatprep.subr.mxu0 0.0
    %450 = vmatpush1.msra.mxu0 0.0
    %451 = vmatprep.subr.mxu0 0.0
    %452 = vmatpush1.msra.mxu0 0.0
    %453 = vmatprep.subr.mxu0 0.0
    %454 = vmatpush1.msra.mxu0 0.0
    %455 = vmatprep.subr.mxu0 0.0
    %456 = vmatpush1.msra.mxu0 0.0
    %457 = vmatprep.subr.mxu0 0.0
    %458 = vmatpush1.msra.mxu0 0.0
    %459 = vmatprep.subr.mxu0 0.0
    %460 = vmatpush1.msra.mxu0 0.0
    %461 = vmatprep.subr.mxu0 0.0
    %462 = vmatpush1.msra.mxu0 0.0
    %463 = vmatprep.subr.mxu0 0.0
    %464 = vmatpush1.msra.mxu0 0.0
    %465 = vmatprep.subr.mxu0 0.0
    %466 = vmatpush1.msra.mxu0 0.0
    %467 = vmatprep.subr.mxu0 0.0
    %468 = vmatpush1.msra.mxu0 0.0
    %469 = vmatprep.mubr.f32.mxu0 0.0
    %470 = vmatmul.mubr.f32.gmra.mrb[0].mxu0 %v67
    %v471 = vpop.f32.mrb[0].mxu0
    %v472 = vadd.f32 0.0, %v471
    %v473 = vpop.f32.mrb[0].mxu0
    %474 = vmatprep.mubr.f32.mxu0 0.0
    %475 = vmatmul.mubr.f32.gmra.mrb[0].mxu0 %v68
    %v476 = vpop.f32.mrb[0].mxu0
    %v477 = vadd.f32 0.0, %v476
    %v478 = vpop.f32.mrb[0].mxu0
    %479 = vmatprep.mubr.f32.mxu0 0.0
    %480 = vmatmul.mubr.f32.gmra.mrb[0].mxu0 %v69
    %v481 = vpop.f32.mrb[0].mxu0
    %v482 = vadd.f32 0.0, %v481
    %v483 = vpop.f32.mrb[0].mxu0
    %484 = vmatprep.mubr.f32.mxu0 0.0
    %485 = vmatmul.mubr.f32.gmra.mrb[0].mxu0 %v70
    %v486 = vpop.f32.mrb[0].mxu0
    %v487 = vadd.f32 0.0, %v486
    %v488 = vpop.f32.mrb[0].mxu0
    %489 = vdwg.mxu0
    %490 = vst [vmem:[#allocation2 + $0x60] sm:$0xff] %v472
    %491 = vst [vmem:[#allocation2 + $0x68] sm:$0xff] %v477
    %492 = vst [vmem:[#allocation2 + $0x70] sm:$0xff] %v482
    %493 = vst [vmem:[#allocation2 + $0x78] sm:$0xff] %v487
    %s494 = scalar_lea.vmem [#allocation8], 512
    %v495 = vld [vmem:[%s494] sm:$0xff]
    %v496 = vld [vmem:[%s494 + $0x8] sm:$0xff]
    %v497 = vld [vmem:[%s494 + $0x10] sm:$0xff]
    %v498 = vld [vmem:[%s494 + $0x18] sm:$0xff]
    %v499 = vld [vmem:[%s494 + $0x20] sm:$0xff]
    %v500 = vld [vmem:[%s494 + $0x28] sm:$0xff]
    %v501 = vld [vmem:[%s494 + $0x30] sm:$0xff]
    %v502 = vld [vmem:[%s494 + $0x38] sm:$0xff]
    %v503 = vld [vmem:[%s494 + $0x40] sm:$0xff]
    %v504 = vld [vmem:[%s494 + $0x48] sm:$0xff]
    %v505 = vld [vmem:[%s494 + $0x50] sm:$0xff]
    %v506 = vld [vmem:[%s494 + $0x58] sm:$0xff]
    %v507 = vld [vmem:[%s494 + $0x60] sm:$0xff]
    %v508 = vld [vmem:[%s494 + $0x68] sm:$0xff]
    %v509 = vld [vmem:[%s494 + $0x70] sm:$0xff]
    %v510 = vld [vmem:[%s494 + $0x78] sm:$0xff]
    %511 = vmatprep.subr.mxu0 0.0
    %512 = vmatpush1.msra.mxu0 %v495
    %513 = vmatprep.subr.mxu0 0.0
    %514 = vmatpush1.msra.mxu0 %v496
    %515 = vmatprep.subr.mxu0 0.0
    %516 = vmatpush1.msra.mxu0 %v497
    %517 = vmatprep.subr.mxu0 0.0
    %518 = vmatpush1.msra.mxu0 %v498
    %519 = vmatprep.subr.mxu0 0.0
    %520 = vmatpush1.msra.mxu0 %v499
    %521 = vmatprep.subr.mxu0 0.0
    %522 = vmatpush1.msra.mxu0 %v500
    %523 = vmatprep.subr.mxu0 0.0
    %524 = vmatpush1.msra.mxu0 %v501
    %525 = vmatprep.subr.mxu0 0.0
    %526 = vmatpush1.msra.mxu0 %v502
    %527 = vmatprep.subr.mxu0 0.0
    %528 = vmatpush1.msra.mxu0 %v503
    %529 = vmatprep.subr.mxu0 0.0
    %530 = vmatpush1.msra.mxu0 %v504
    %531 = vmatprep.subr.mxu0 0.0
    %532 = vmatpush1.msra.mxu0 %v505
    %533 = vmatprep.subr.mxu0 0.0
    %534 = vmatpush1.msra.mxu0 %v506
    %535 = vmatprep.subr.mxu0 0.0
    %536 = vmatpush1.msra.mxu0 %v507
    %537 = vmatprep.subr.mxu0 0.0
    %538 = vmatpush1.msra.mxu0 %v508
    %539 = vmatprep.subr.mxu0 0.0
    %540 = vmatpush1.msra.mxu0 %v509
    %541 = vmatprep.subr.mxu0 0.0
    %542 = vmatpush1.msra.mxu0 %v510
    %543 = vmatprep.subr.mxu0 0.0
    %544 = vmatpush1.msra.mxu0 0.0
    %545 = vmatprep.subr.mxu0 0.0
    %546 = vmatpush1.msra.mxu0 0.0
    %547 = vmatprep.subr.mxu0 0.0
    %548 = vmatpush1.msra.mxu0 0.0
    %549 = vmatprep.subr.mxu0 0.0
    %550 = vmatpush1.msra.mxu0 0.0
    %551 = vmatprep.subr.mxu0 0.0
    %552 = vmatpush1.msra.mxu0 0.0
    %553 = vmatprep.subr.mxu0 0.0
    %554 = vmatpush1.msra.mxu0 0.0
    %555 = vmatprep.subr.mxu0 0.0
    %556 = vmatpush1.msra.mxu0 0.0
    %557 = vmatprep.subr.mxu0 0.0
    %558 = vmatpush1.msra.mxu0 0.0
    %559 = vmatprep.subr.mxu0 0.0
    %560 = vmatpush1.msra.mxu0 0.0
    %561 = vmatprep.subr.mxu0 0.0
    %562 = vmatpush1.msra.mxu0 0.0
    %563 = vmatprep.subr.mxu0 0.0
    %564 = vmatpush1.msra.mxu0 0.0
    %565 = vmatprep.subr.mxu0 0.0
    %566 = vmatpush1.msra.mxu0 0.0
    %567 = vmatprep.subr.mxu0 0.0
    %568 = vmatpush1.msra.mxu0 0.0
    %569 = vmatprep.subr.mxu0 0.0
    %570 = vmatpush1.msra.mxu0 0.0
    %571 = vmatprep.subr.mxu0 0.0
    %572 = vmatpush1.msra.mxu0 0.0
    %573 = vmatprep.subr.mxu0 0.0
    %574 = vmatpush1.msra.mxu0 0.0
    %575 = vmatprep.mubr.f32.mxu0 0.0
    %576 = vmatmul.mubr.f32.gmra.mrb[0].mxu0 %v67
    %v577 = vpop.f32.mrb[0].mxu0
    %v578 = vadd.f32 0.0, %v577
    %v579 = vpop.f32.mrb[0].mxu0
    %580 = vmatprep.mubr.f32.mxu0 0.0
    %581 = vmatmul.mubr.f32.gmra.mrb[0].mxu0 %v68
    %v582 = vpop.f32.mrb[0].mxu0
    %v583 = vadd.f32 0.0, %v582
    %v584 = vpop.f32.mrb[0].mxu0
    %585 = vmatprep.mubr.f32.mxu0 0.0
    %586 = vmatmul.mubr.f32.gmra.mrb[0].mxu0 %v69
    %v587 = vpop.f32.mrb[0].mxu0
    %v588 = vadd.f32 0.0, %v587
    %v589 = vpop.f32.mrb[0].mxu0
    %590 = vmatprep.mubr.f32.mxu0 0.0
    %591 = vmatmul.mubr.f32.gmra.mrb[0].mxu0 %v70
    %v592 = vpop.f32.mrb[0].mxu0
    %v593 = vadd.f32 0.0, %v592
    %v594 = vpop.f32.mrb[0].mxu0
    %595 = vdwg.mxu0
    %596 = vst [vmem:[#allocation2 + $0x80] sm:$0xff] %v578
    %597 = vst [vmem:[#allocation2 + $0x88] sm:$0xff] %v583
    %598 = vst [vmem:[#allocation2 + $0x90] sm:$0xff] %v588
    %599 = vst [vmem:[#allocation2 + $0x98] sm:$0xff] %v593
    %v600 = vld [vmem:[#allocation6] sm:$0xff]
    %v601 = vld [vmem:[#allocation6 + $0x8] sm:$0xff]
    %v602 = vld [vmem:[#allocation6 + $0x10] sm:$0xff]
    %v603 = vld [vmem:[#allocation6 + $0x18] sm:$0xff]
    %v604 = vld [vmem:[#allocation6 + $0x20] sm:$0xff]
    %v605 = vld [vmem:[#allocation6 + $0x28] sm:$0xff]
    %v606 = vld [vmem:[#allocation6 + $0x30] sm:$0xff]
    %v607 = vld [vmem:[#allocation6 + $0x38] sm:$0xff]
    %v608 = vld [vmem:[#allocation2] sm:$0xff]
    %v609 = vld [vmem:[#allocation2 + $0x8] sm:$0xff]
    %v610 = vld [vmem:[#allocation2 + $0x10] sm:$0xff]
    %v611 = vld [vmem:[#allocation2 + $0x18] sm:$0xff]
    %v612 = vld [vmem:[#allocation2 + $0x20] sm:$0xff]
    %v613 = vld [vmem:[#allocation2 + $0x28] sm:$0xff]
    %v614 = vld [vmem:[#allocation2 + $0x30] sm:$0xff]
    %v615 = vld [vmem:[#allocation2 + $0x38] sm:$0xff]
    %v616 = vld [vmem:[#allocation2 + $0x40] sm:$0xff]
    %v617 = vld [vmem:[#allocation2 + $0x48] sm:$0xff]
    %v618 = vld [vmem:[#allocation2 + $0x50] sm:$0xff]
    %v619 = vld [vmem:[#allocation2 + $0x58] sm:$0xff]
    %v620 = vld [vmem:[#allocation2 + $0x60] sm:$0xff]
    %v621 = vld [vmem:[#allocation2 + $0x68] sm:$0xff]
    %v622 = vld [vmem:[#allocation2 + $0x70] sm:$0xff]
    %v623 = vld [vmem:[#allocation2 + $0x78] sm:$0xff]
    %v624 = vld [vmem:[#allocation2 + $0x80] sm:$0xff]
    %v625 = vld [vmem:[#allocation2 + $0x88] sm:$0xff]
    %v626 = vld [vmem:[#allocation2 + $0x90] sm:$0xff]
    %v627 = vld [vmem:[#allocation2 + $0x98] sm:$0xff]
    %v629 = vlaneseq
    %v630 = vshrl.u32 %v629, 7
    %v631 = vsub.s32 0, %v630
    %v632 = vrot.slane %v66, %v631
    %vm634 = vcmask 261120
    %v636 = vsel %vm634, %v601, 0
    %v639 = vsel %vm634, %v603, 0
    %v642 = vsel %vm634, %v605, 0
    %v645 = vsel %vm634, %v607, 0
    %647 = vmatprep.subr.mxu0 0.0
    %648 = vmatpush1.msra.mxu0 %v608
    %649 = vmatprep.subr.mxu0 0.0
    %650 = vmatpush1.msra.mxu0 %v609
    %651 = vmatprep.subr.mxu0 0.0
    %652 = vmatpush1.msra.mxu0 %v610
    %653 = vmatprep.subr.mxu0 0.0
    %654 = vmatpush1.msra.mxu0 %v611
    %655 = vmatprep.subr.mxu0 0.0
    %656 = vmatpush1.msra.mxu0 %v612
    %657 = vmatprep.subr.mxu0 0.0
    %658 = vmatpush1.msra.mxu0 %v613
    %659 = vmatprep.subr.mxu0 0.0
    %660 = vmatpush1.msra.mxu0 %v614
    %661 = vmatprep.subr.mxu0 0.0
    %662 = vmatpush1.msra.mxu0 %v615
    %663 = vmatprep.subr.mxu0 0.0
    %664 = vmatpush1.msra.mxu0 %v616
    %665 = vmatprep.subr.mxu0 0.0
    %666 = vmatpush1.msra.mxu0 %v617
    %667 = vmatprep.subr.mxu0 0.0
    %668 = vmatpush1.msra.mxu0 %v618
    %669 = vmatprep.subr.mxu0 0.0
    %670 = vmatpush1.msra.mxu0 %v619
    %671 = vmatprep.subr.mxu0 0.0
    %672 = vmatpush1.msra.mxu0 %v620
    %673 = vmatprep.subr.mxu0 0.0
    %674 = vmatpush1.msra.mxu0 %v621
    %675 = vmatprep.subr.mxu0 0.0
    %676 = vmatpush1.msra.mxu0 %v622
    %677 = vmatprep.subr.mxu0 0.0
    %678 = vmatpush1.msra.mxu0 %v623
    %679 = vmatprep.subr.mxu0 0.0
    %680 = vmatpush1.msra.mxu0 %v624
    %681 = vmatprep.subr.mxu0 0.0
    %682 = vmatpush1.msra.mxu0 %v625
    %683 = vmatprep.subr.mxu0 0.0
    %684 = vmatpush1.msra.mxu0 %v626
    %685 = vmatprep.subr.mxu0 0.0
    %686 = vmatpush1.msra.mxu0 %v627
    %687 = vmatprep.subr.mxu0 0.0
    %688 = vmatpush1.msra.mxu0 0.0
    %689 = vmatprep.subr.mxu0 0.0
    %690 = vmatpush1.msra.mxu0 0.0
    %691 = vmatprep.subr.mxu0 0.0
    %692 = vmatpush1.msra.mxu0 0.0
    %693 = vmatprep.subr.mxu0 0.0
    %694 = vmatpush1.msra.mxu0 0.0
    %695 = vmatprep.subr.mxu0 0.0
    %696 = vmatpush1.msra.mxu0 0.0
    %697 = vmatprep.subr.mxu0 0.0
    %698 = vmatpush1.msra.mxu0 0.0
    %699 = vmatprep.subr.mxu0 0.0
    %700 = vmatpush1.msra.mxu0 0.0
    %701 = vmatprep.subr.mxu0 0.0
    %702 = vmatpush1.msra.mxu0 0.0
    %703 = vmatprep.subr.mxu0 0.0
    %704 = vmatpush1.msra.mxu0 0.0
    %705 = vmatprep.subr.mxu0 0.0
    %706 = vmatpush1.msra.mxu0 0.0
    %707 = vmatprep.subr.mxu0 0.0
    %708 = vmatpush1.msra.mxu0 0.0
    %709 = vmatprep.subr.mxu0 0.0
    %710 = vmatpush1.msra.mxu0 0.0
    %711 = vmatprep.mubr.f32.mxu0 %v636
    %712 = vmatmul.mubr.f32.gmra.mrb[0].mxu0 %v600
    %v713 = vpop.f32.mrb[0].mxu0
    %v714 = vadd.f32 %v632, %v713
    %v715 = vpop.f32.mrb[0].mxu0
    %716 = vmatprep.mubr.f32.mxu0 %v639
    %717 = vmatmul.mubr.f32.gmra.mrb[0].mxu0 %v602
    %v718 = vpop.f32.mrb[0].mxu0
    %v719 = vadd.f32 %v632, %v718
    %v720 = vpop.f32.mrb[0].mxu0
    %721 = vmatprep.mubr.f32.mxu0 %v642
    %722 = vmatmul.mubr.f32.gmra.mrb[0].mxu0 %v604
    %v723 = vpop.f32.mrb[0].mxu0
    %v724 = vadd.f32 %v632, %v723
    %v725 = vpop.f32.mrb[0].mxu0
    %726 = vmatprep.mubr.f32.mxu0 %v645
    %727 = vmatmul.mubr.f32.gmra.mrb[0].mxu0 %v606
    %v728 = vpop.f32.mrb[0].mxu0
    %v729 = vadd.f32 %v632, %v728
    %v730 = vpop.f32.mrb[0].mxu0
    %731 = vdwg.mxu0
    %732 = vst [vmem:[#allocation10] sm:$0xff] %v714
    %733 = vst [vmem:[#allocation10 + $0x8] sm:$0xff] %v719
    %734 = vst [vmem:[#allocation10 + $0x10] sm:$0xff] %v724
    %735 = vst [vmem:[#allocation10 + $0x18] sm:$0xff] %v729
    %v736 = vmax.f32 %v714, 0.0
    %v737 = vmax.f32 %v719, 0.0
    %v738 = vmax.f32 %v724, 0.0
    %v739 = vmax.f32 %v729, 0.0
    %v740 = vld [vmem:[#allocation8] sm:$0xff]
    %v741 = vld [vmem:[#allocation8 + $0x8] sm:$0xff]
    %v742 = vld [vmem:[#allocation8 + $0x10] sm:$0xff]
    %v743 = vld [vmem:[#allocation8 + $0x18] sm:$0xff]
    %v744 = vld [vmem:[#allocation8 + $0x20] sm:$0xff]
    %v745 = vld [vmem:[#allocation8 + $0x28] sm:$0xff]
    %v746 = vld [vmem:[#allocation8 + $0x30] sm:$0xff]
    %v747 = vld [vmem:[#allocation8 + $0x38] sm:$0xff]
    %v748 = vld [vmem:[#allocation8 + $0x40] sm:$0xff]
    %v749 = vld [vmem:[#allocation8 + $0x48] sm:$0xff]
    %v750 = vld [vmem:[#allocation8 + $0x50] sm:$0xff]
    %v751 = vld [vmem:[#allocation8 + $0x58] sm:$0xff]
    %v752 = vld [vmem:[#allocation8 + $0x60] sm:$0xff]
    %v753 = vld [vmem:[#allocation8 + $0x68] sm:$0xff]
    %v754 = vld [vmem:[#allocation8 + $0x70] sm:$0xff]
    %v755 = vld [vmem:[#allocation8 + $0x78] sm:$0xff]
    %756 = vmatprep.subr.mxu0 0.0
    %757 = vmatpush1.msra.mxu0 %v740
    %758 = vmatprep.subr.mxu0 0.0
    %759 = vmatpush1.msra.mxu0 %v741
    %760 = vmatprep.subr.mxu0 0.0
    %761 = vmatpush1.msra.mxu0 %v742
    %762 = vmatprep.subr.mxu0 0.0
    %763 = vmatpush1.msra.mxu0 %v743
    %764 = vmatprep.subr.mxu0 0.0
    %765 = vmatpush1.msra.mxu0 %v744
    %766 = vmatprep.subr.mxu0 0.0
    %767 = vmatpush1.msra.mxu0 %v745
    %768 = vmatprep.subr.mxu0 0.0
    %769 = vmatpush1.msra.mxu0 %v746
    %770 = vmatprep.subr.mxu0 0.0
    %771 = vmatpush1.msra.mxu0 %v747
    %772 = vmatprep.subr.mxu0 0.0
    %773 = vmatpush1.msra.mxu0 %v748
    %774 = vmatprep.subr.mxu0 0.0
    %775 = vmatpush1.msra.mxu0 %v749
    %776 = vmatprep.subr.mxu0 0.0
    %777 = vmatpush1.msra.mxu0 %v750
    %778 = vmatprep.subr.mxu0 0.0
    %779 = vmatpush1.msra.mxu0 %v751
    %780 = vmatprep.subr.mxu0 0.0
    %781 = vmatpush1.msra.mxu0 %v752
    %782 = vmatprep.subr.mxu0 0.0
    %783 = vmatpush1.msra.mxu0 %v753
    %784 = vmatprep.subr.mxu0 0.0
    %785 = vmatpush1.msra.mxu0 %v754
    %786 = vmatprep.subr.mxu0 0.0
    %787 = vmatpush1.msra.mxu0 %v755
    %788 = vmatprep.subr.mxu0 0.0
    %789 = vmatpush1.msra.mxu0 0.0
    %790 = vmatprep.subr.mxu0 0.0
    %791 = vmatpush1.msra.mxu0 0.0
    %792 = vmatprep.subr.mxu0 0.0
    %793 = vmatpush1.msra.mxu0 0.0
    %794 = vmatprep.subr.mxu0 0.0
    %795 = vmatpush1.msra.mxu0 0.0
    %796 = vmatprep.subr.mxu0 0.0
    %797 = vmatpush1.msra.mxu0 0.0
    %798 = vmatprep.subr.mxu0 0.0
    %799 = vmatpush1.msra.mxu0 0.0
    %800 = vmatprep.subr.mxu0 0.0
    %801 = vmatpush1.msra.mxu0 0.0
    %802 = vmatprep.subr.mxu0 0.0
    %803 = vmatpush1.msra.mxu0 0.0
    %804 = vmatprep.subr.mxu0 0.0
    %805 = vmatpush1.msra.mxu0 0.0
    %806 = vmatprep.subr.mxu0 0.0
    %807 = vmatpush1.msra.mxu0 0.0
    %808 = vmatprep.subr.mxu0 0.0
    %809 = vmatpush1.msra.mxu0 0.0
    %810 = vmatprep.subr.mxu0 0.0
    %811 = vmatpush1.msra.mxu0 0.0
    %812 = vmatprep.subr.mxu0 0.0
    %813 = vmatpush1.msra.mxu0 0.0
    %814 = vmatprep.subr.mxu0 0.0
    %815 = vmatpush1.msra.mxu0 0.0
    %816 = vmatprep.subr.mxu0 0.0
    %817 = vmatpush1.msra.mxu0 0.0
    %818 = vmatprep.subr.mxu0 0.0
    %819 = vmatpush1.msra.mxu0 0.0
    %820 = vmatprep.mubr.f32.mxu0 0.0
    %821 = vmatmul.mubr.f32.gmra.mrb[0].mxu0 %v736
    %v822 = vpop.f32.mrb[0].mxu0
    %v823 = vadd.f32 0.0, %v822
    %v824 = vpop.f32.mrb[0].mxu0
    %825 = vmatprep.mubr.f32.mxu0 0.0
    %826 = vmatmul.mubr.f32.gmra.mrb[0].mxu0 %v737
    %v827 = vpop.f32.mrb[0].mxu0
    %v828 = vadd.f32 0.0, %v827
    %v829 = vpop.f32.mrb[0].mxu0
    %830 = vmatprep.mubr.f32.mxu0 0.0
    %831 = vmatmul.mubr.f32.gmra.mrb[0].mxu0 %v738
    %v832 = vpop.f32.mrb[0].mxu0
    %v833 = vadd.f32 0.0, %v832
    %v834 = vpop.f32.mrb[0].mxu0
    %835 = vmatprep.mubr.f32.mxu0 0.0
    %836 = vmatmul.mubr.f32.gmra.mrb[0].mxu0 %v739
    %v837 = vpop.f32.mrb[0].mxu0
    %v838 = vadd.f32 0.0, %v837
    %v839 = vpop.f32.mrb[0].mxu0
    %840 = vdwg.mxu0
    %841 = vst [vmem:[#allocation2] sm:$0xff] %v823
    %842 = vst [vmem:[#allocation2 + $0x8] sm:$0xff] %v828
    %843 = vst [vmem:[#allocation2 + $0x10] sm:$0xff] %v833
    %844 = vst [vmem:[#allocation2 + $0x18] sm:$0xff] %v838
    %v845 = vld [vmem:[%s176] sm:$0xff]
    %v846 = vld [vmem:[%s176 + $0x8] sm:$0xff]
    %v847 = vld [vmem:[%s176 + $0x10] sm:$0xff]
    %v848 = vld [vmem:[%s176 + $0x18] sm:$0xff]
    %v849 = vld [vmem:[%s176 + $0x20] sm:$0xff]
    %v850 = vld [vmem:[%s176 + $0x28] sm:$0xff]
    %v851 = vld [vmem:[%s176 + $0x30] sm:$0xff]
    %v852 = vld [vmem:[%s176 + $0x38] sm:$0xff]
    %v853 = vld [vmem:[%s176 + $0x40] sm:$0xff]
    %v854 = vld [vmem:[%s176 + $0x48] sm:$0xff]
    %v855 = vld [vmem:[%s176 + $0x50] sm:$0xff]
    %v856 = vld [vmem:[%s176 + $0x58] sm:$0xff]
    %v857 = vld [vmem:[%s176 + $0x60] sm:$0xff]
    %v858 = vld [vmem:[%s176 + $0x68] sm:$0xff]
    %v859 = vld [vmem:[%s176 + $0x70] sm:$0xff]
    %v860 = vld [vmem:[%s176 + $0x78] sm:$0xff]
    %861 = vmatprep.subr.mxu0 0.0
    %862 = vmatpush1.msra.mxu0 %v845
    %863 = vmatprep.subr.mxu0 0.0
    %864 = vmatpush1.msra.mxu0 %v846
    %865 = vmatprep.subr.mxu0 0.0
    %866 = vmatpush1.msra.mxu0 %v847
    %867 = vmatprep.subr.mxu0 0.0
    %868 = vmatpush1.msra.mxu0 %v848
    %869 = vmatprep.subr.mxu0 0.0
    %870 = vmatpush1.msra.mxu0 %v849
    %871 = vmatprep.subr.mxu0 0.0
    %872 = vmatpush1.msra.mxu0 %v850
    %873 = vmatprep.subr.mxu0 0.0
    %874 = vmatpush1.msra.mxu0 %v851
    %875 = vmatprep.subr.mxu0 0.0
    %876 = vmatpush1.msra.mxu0 %v852
    %877 = vmatprep.subr.mxu0 0.0
    %878 = vmatpush1.msra.mxu0 %v853
    %879 = vmatprep.subr.mxu0 0.0
    %880 = vmatpush1.msra.mxu0 %v854
    %881 = vmatprep.subr.mxu0 0.0
    %882 = vmatpush1.msra.mxu0 %v855
    %883 = vmatprep.subr.mxu0 0.0
    %884 = vmatpush1.msra.mxu0 %v856
    %885 = vmatprep.subr.mxu0 0.0
    %886 = vmatpush1.msra.mxu0 %v857
    %887 = vmatprep.subr.mxu0 0.0
    %888 = vmatpush1.msra.mxu0 %v858
    %889 = vmatprep.subr.mxu0 0.0
    %890 = vmatpush1.msra.mxu0 %v859
    %891 = vmatprep.subr.mxu0 0.0
    %892 = vmatpush1.msra.mxu0 %v860
    %893 = vmatprep.subr.mxu0 0.0
    %894 = vmatpush1.msra.mxu0 0.0
    %895 = vmatprep.subr.mxu0 0.0
    %896 = vmatpush1.msra.mxu0 0.0
    %897 = vmatprep.subr.mxu0 0.0
    %898 = vmatpush1.msra.mxu0 0.0
    %899 = vmatprep.subr.mxu0 0.0
    %900 = vmatpush1.msra.mxu0 0.0
    %901 = vmatprep.subr.mxu0 0.0
    %902 = vmatpush1.msra.mxu0 0.0
    %903 = vmatprep.subr.mxu0 0.0
    %904 = vmatpush1.msra.mxu0 0.0
    %905 = vmatprep.subr.mxu0 0.0
    %906 = vmatpush1.msra.mxu0 0.0
    %907 = vmatprep.subr.mxu0 0.0
    %908 = vmatpush1.msra.mxu0 0.0
    %909 = vmatprep.subr.mxu0 0.0
    %910 = vmatpush1.msra.mxu0 0.0
    %911 = vmatprep.subr.mxu0 0.0
    %912 = vmatpush1.msra.mxu0 0.0
    %913 = vmatprep.subr.mxu0 0.0
    %914 = vmatpush1.msra.mxu0 0.0
    %915 = vmatprep.subr.mxu0 0.0
    %916 = vmatpush1.msra.mxu0 0.0
    %917 = vmatprep.subr.mxu0 0.0
    %918 = vmatpush1.msra.mxu0 0.0
    %919 = vmatprep.subr.mxu0 0.0
    %920 = vmatpush1.msra.mxu0 0.0
    %921 = vmatprep.subr.mxu0 0.0
    %922 = vmatpush1.msra.mxu0 0.0
    %923 = vmatprep.subr.mxu0 0.0
    %924 = vmatpush1.msra.mxu0 0.0
    %925 = vmatprep.mubr.f32.mxu0 0.0
    %926 = vmatmul.mubr.f32.gmra.mrb[0].mxu0 %v736
    %v927 = vpop.f32.mrb[0].mxu0
    %v928 = vadd.f32 0.0, %v927
    %v929 = vpop.f32.mrb[0].mxu0
    %930 = vmatprep.mubr.f32.mxu0 0.0
    %931 = vmatmul.mubr.f32.gmra.mrb[0].mxu0 %v737
    %v932 = vpop.f32.mrb[0].mxu0
    %v933 = vadd.f32 0.0, %v932
    %v934 = vpop.f32.mrb[0].mxu0
    %935 = vmatprep.mubr.f32.mxu0 0.0
    %936 = vmatmul.mubr.f32.gmra.mrb[0].mxu0 %v738
    %v937 = vpop.f32.mrb[0].mxu0
    %v938 = vadd.f32 0.0, %v937
    %v939 = vpop.f32.mrb[0].mxu0
    %940 = vmatprep.mubr.f32.mxu0 0.0
    %941 = vmatmul.mubr.f32.gmra.mrb[0].mxu0 %v739
    %v942 = vpop.f32.mrb[0].mxu0
    %v943 = vadd.f32 0.0, %v942
    %v944 = vpop.f32.mrb[0].mxu0
    %945 = vdwg.mxu0
    %946 = vst [vmem:[#allocation2 + $0x20] sm:$0xff] %v928
    %947 = vst [vmem:[#allocation2 + $0x28] sm:$0xff] %v933
    %948 = vst [vmem:[#allocation2 + $0x30] sm:$0xff] %v938
    %949 = vst [vmem:[#allocation2 + $0x38] sm:$0xff] %v943
    %v950 = vld [vmem:[%s282] sm:$0xff]
    %v951 = vld [vmem:[%s282 + $0x8] sm:$0xff]
    %v952 = vld [vmem:[%s282 + $0x10] sm:$0xff]
    %v953 = vld [vmem:[%s282 + $0x18] sm:$0xff]
    %v954 = vld [vmem:[%s282 + $0x20] sm:$0xff]
    %v955 = vld [vmem:[%s282 + $0x28] sm:$0xff]
    %v956 = vld [vmem:[%s282 + $0x30] sm:$0xff]
    %v957 = vld [vmem:[%s282 + $0x38] sm:$0xff]
    %v958 = vld [vmem:[%s282 + $0x40] sm:$0xff]
    %v959 = vld [vmem:[%s282 + $0x48] sm:$0xff]
    %v960 = vld [vmem:[%s282 + $0x50] sm:$0xff]
    %v961 = vld [vmem:[%s282 + $0x58] sm:$0xff]
    %v962 = vld [vmem:[%s282 + $0x60] sm:$0xff]
    %v963 = vld [vmem:[%s282 + $0x68] sm:$0xff]
    %v964 = vld [vmem:[%s282 + $0x70] sm:$0xff]
    %v965 = vld [vmem:[%s282 + $0x78] sm:$0xff]
    %966 = vmatprep.subr.mxu0 0.0
    %967 = vmatpush1.msra.mxu0 %v950
    %968 = vmatprep.subr.mxu0 0.0
    %969 = vmatpush1.msra.mxu0 %v951
    %970 = vmatprep.subr.mxu0 0.0
    %971 = vmatpush1.msra.mxu0 %v952
    %972 = vmatprep.subr.mxu0 0.0
    %973 = vmatpush1.msra.mxu0 %v953
    %974 = vmatprep.subr.mxu0 0.0
    %975 = vmatpush1.msra.mxu0 %v954
    %976 = vmatprep.subr.mxu0 0.0
    %977 = vmatpush1.msra.mxu0 %v955
    %978 = vmatprep.subr.mxu0 0.0
    %979 = vmatpush1.msra.mxu0 %v956
    %980 = vmatprep.subr.mxu0 0.0
    %981 = vmatpush1.msra.mxu0 %v957
    %982 = vmatprep.subr.mxu0 0.0
    %983 = vmatpush1.msra.mxu0 %v958
    %984 = vmatprep.subr.mxu0 0.0
    %985 = vmatpush1.msra.mxu0 %v959
    %986 = vmatprep.subr.mxu0 0.0
    %987 = vmatpush1.msra.mxu0 %v960
    %988 = vmatprep.subr.mxu0 0.0
    %989 = vmatpush1.msra.mxu0 %v961
    %990 = vmatprep.subr.mxu0 0.0
    %991 = vmatpush1.msra.mxu0 %v962
    %992 = vmatprep.subr.mxu0 0.0
    %993 = vmatpush1.msra.mxu0 %v963
    %994 = vmatprep.subr.mxu0 0.0
    %995 = vmatpush1.msra.mxu0 %v964
    %996 = vmatprep.subr.mxu0 0.0
    %997 = vmatpush1.msra.mxu0 %v965
    %998 = vmatprep.subr.mxu0 0.0
    %999 = vmatpush1.msra.mxu0 0.0
    %1000 = vmatprep.subr.mxu0 0.0
    %1001 = vmatpush1.msra.mxu0 0.0
    %1002 = vmatprep.subr.mxu0 0.0
    %1003 = vmatpush1.msra.mxu0 0.0
    %1004 = vmatprep.subr.mxu0 0.0
    %1005 = vmatpush1.msra.mxu0 0.0
    %1006 = vmatprep.subr.mxu0 0.0
    %1007 = vmatpush1.msra.mxu0 0.0
    %1008 = vmatprep.subr.mxu0 0.0
    %1009 = vmatpush1.msra.mxu0 0.0
    %1010 = vmatprep.subr.mxu0 0.0
    %1011 = vmatpush1.msra.mxu0 0.0
    %1012 = vmatprep.subr.mxu0 0.0
    %1013 = vmatpush1.msra.mxu0 0.0
    %1014 = vmatprep.subr.mxu0 0.0
    %1015 = vmatpush1.msra.mxu0 0.0
    %1016 = vmatprep.subr.mxu0 0.0
    %1017 = vmatpush1.msra.mxu0 0.0
    %1018 = vmatprep.subr.mxu0 0.0
    %1019 = vmatpush1.msra.mxu0 0.0
    %1020 = vmatprep.subr.mxu0 0.0
    %1021 = vmatpush1.msra.mxu0 0.0
    %1022 = vmatprep.subr.mxu0 0.0
    %1023 = vmatpush1.msra.mxu0 0.0
    %1024 = vmatprep.subr.mxu0 0.0
    %1025 = vmatpush1.msra.mxu0 0.0
    %1026 = vmatprep.subr.mxu0 0.0
    %1027 = vmatpush1.msra.mxu0 0.0
    %1028 = vmatprep.subr.mxu0 0.0
    %1029 = vmatpush1.msra.mxu0 0.0
    %1030 = vmatprep.mubr.f32.mxu0 0.0
    %1031 = vmatmul.mubr.f32.gmra.mrb[0].mxu0 %v736
    %v1032 = vpop.f32.mrb[0].mxu0
    %v1033 = vadd.f32 0.0, %v1032
    %v1034 = vpop.f32.mrb[0].mxu0
    %1035 = vmatprep.mubr.f32.mxu0 0.0
    %1036 = vmatmul.mubr.f32.gmra.mrb[0].mxu0 %v737
    %v1037 = vpop.f32.mrb[0].mxu0
    %v1038 = vadd.f32 0.0, %v1037
    %v1039 = vpop.f32.mrb[0].mxu0
    %1040 = vmatprep.mubr.f32.mxu0 0.0
    %1041 = vmatmul.mubr.f32.gmra.mrb[0].mxu0 %v738
    %v1042 = vpop.f32.mrb[0].mxu0
    %v1043 = vadd.f32 0.0, %v1042
    %v1044 = vpop.f32.mrb[0].mxu0
    %1045 = vmatprep.mubr.f32.mxu0 0.0
    %1046 = vmatmul.mubr.f32.gmra.mrb[0].mxu0 %v739
    %v1047 = vpop.f32.mrb[0].mxu0
    %v1048 = vadd.f32 0.0, %v1047
    %v1049 = vpop.f32.mrb[0].mxu0
    %1050 = vdwg.mxu0
    %1051 = vst [vmem:[#allocation2 + $0x40] sm:$0xff] %v1033
    %1052 = vst [vmem:[#allocation2 + $0x48] sm:$0xff] %v1038
    %1053 = vst [vmem:[#allocation2 + $0x50] sm:$0xff] %v1043
    %1054 = vst [vmem:[#allocation2 + $0x58] sm:$0xff] %v1048
    %v1055 = vld [vmem:[%s388] sm:$0xff]
    %v1056 = vld [vmem:[%s388 + $0x8] sm:$0xff]
    %v1057 = vld [vmem:[%s388 + $0x10] sm:$0xff]
    %v1058 = vld [vmem:[%s388 + $0x18] sm:$0xff]
    %v1059 = vld [vmem:[%s388 + $0x20] sm:$0xff]
    %v1060 = vld [vmem:[%s388 + $0x28] sm:$0xff]
    %v1061 = vld [vmem:[%s388 + $0x30] sm:$0xff]
    %v1062 = vld [vmem:[%s388 + $0x38] sm:$0xff]
    %v1063 = vld [vmem:[%s388 + $0x40] sm:$0xff]
    %v1064 = vld [vmem:[%s388 + $0x48] sm:$0xff]
    %v1065 = vld [vmem:[%s388 + $0x50] sm:$0xff]
    %v1066 = vld [vmem:[%s388 + $0x58] sm:$0xff]
    %v1067 = vld [vmem:[%s388 + $0x60] sm:$0xff]
    %v1068 = vld [vmem:[%s388 + $0x68] sm:$0xff]
    %v1069 = vld [vmem:[%s388 + $0x70] sm:$0xff]
    %v1070 = vld [vmem:[%s388 + $0x78] sm:$0xff]
    %1071 = vmatprep.subr.mxu0 0.0
    %1072 = vmatpush1.msra.mxu0 %v1055
    %1073 = vmatprep.subr.mxu0 0.0
    %1074 = vmatpush1.msra.mxu0 %v1056
    %1075 = vmatprep.subr.mxu0 0.0
    %1076 = vmatpush1.msra.mxu0 %v1057
    %1077 = vmatprep.subr.mxu0 0.0
    %1078 = vmatpush1.msra.mxu0 %v1058
    %1079 = vmatprep.subr.mxu0 0.0
    %1080 = vmatpush1.msra.mxu0 %v1059
    %1081 = vmatprep.subr.mxu0 0.0
    %1082 = vmatpush1.msra.mxu0 %v1060
    %1083 = vmatprep.subr.mxu0 0.0
    %1084 = vmatpush1.msra.mxu0 %v1061
    %1085 = vmatprep.subr.mxu0 0.0
    %1086 = vmatpush1.msra.mxu0 %v1062
    %1087 = vmatprep.subr.mxu0 0.0
    %1088 = vmatpush1.msra.mxu0 %v1063
    %1089 = vmatprep.subr.mxu0 0.0
    %1090 = vmatpush1.msra.mxu0 %v1064
    %1091 = vmatprep.subr.mxu0 0.0
    %1092 = vmatpush1.msra.mxu0 %v1065
    %1093 = vmatprep.subr.mxu0 0.0
    %1094 = vmatpush1.msra.mxu0 %v1066
    %1095 = vmatprep.subr.mxu0 0.0
    %1096 = vmatpush1.msra.mxu0 %v1067
    %1097 = vmatprep.subr.mxu0 0.0
    %1098 = vmatpush1.msra.mxu0 %v1068
    %1099 = vmatprep.subr.mxu0 0.0
    %1100 = vmatpush1.msra.mxu0 %v1069
    %1101 = vmatprep.subr.mxu0 0.0
    %1102 = vmatpush1.msra.mxu0 %v1070
    %1103 = vmatprep.subr.mxu0 0.0
    %1104 = vmatpush1.msra.mxu0 0.0
    %1105 = vmatprep.subr.mxu0 0.0
    %1106 = vmatpush1.msra.mxu0 0.0
    %1107 = vmatprep.subr.mxu0 0.0
    %1108 = vmatpush1.msra.mxu0 0.0
    %1109 = vmatprep.subr.mxu0 0.0
    %1110 = vmatpush1.msra.mxu0 0.0
    %1111 = vmatprep.subr.mxu0 0.0
    %1112 = vmatpush1.msra.mxu0 0.0
    %1113 = vmatprep.subr.mxu0 0.0
    %1114 = vmatpush1.msra.mxu0 0.0
    %1115 = vmatprep.subr.mxu0 0.0
    %1116 = vmatpush1.msra.mxu0 0.0
    %1117 = vmatprep.subr.mxu0 0.0
    %1118 = vmatpush1.msra.mxu0 0.0
    %1119 = vmatprep.subr.mxu0 0.0
    %1120 = vmatpush1.msra.mxu0 0.0
    %1121 = vmatprep.subr.mxu0 0.0
    %1122 = vmatpush1.msra.mxu0 0.0
    %1123 = vmatprep.subr.mxu0 0.0
    %1124 = vmatpush1.msra.mxu0 0.0
    %1125 = vmatprep.subr.mxu0 0.0
    %1126 = vmatpush1.msra.mxu0 0.0
    %1127 = vmatprep.subr.mxu0 0.0
    %1128 = vmatpush1.msra.mxu0 0.0
    %1129 = vmatprep.subr.mxu0 0.0
    %1130 = vmatpush1.msra.mxu0 0.0
    %1131 = vmatprep.subr.mxu0 0.0
    %1132 = vmatpush1.msra.mxu0 0.0
    %1133 = vmatprep.subr.mxu0 0.0
    %1134 = vmatpush1.msra.mxu0 0.0
    %1135 = vmatprep.mubr.f32.mxu0 0.0
    %1136 = vmatmul.mubr.f32.gmra.mrb[0].mxu0 %v736
    %v1137 = vpop.f32.mrb[0].mxu0
    %v1138 = vadd.f32 0.0, %v1137
    %v1139 = vpop.f32.mrb[0].mxu0
    %1140 = vmatprep.mubr.f32.mxu0 0.0
    %1141 = vmatmul.mubr.f32.gmra.mrb[0].mxu0 %v737
    %v1142 = vpop.f32.mrb[0].mxu0
    %v1143 = vadd.f32 0.0, %v1142
    %v1144 = vpop.f32.mrb[0].mxu0
    %1145 = vmatprep.mubr.f32.mxu0 0.0
    %1146 = vmatmul.mubr.f32.gmra.mrb[0].mxu0 %v738
    %v1147 = vpop.f32.mrb[0].mxu0
    %v1148 = vadd.f32 0.0, %v1147
    %v1149 = vpop.f32.mrb[0].mxu0
    %1150 = vmatprep.mubr.f32.mxu0 0.0
    %1151 = vmatmul.mubr.f32.gmra.mrb[0].mxu0 %v739
    %v1152 = vpop.f32.mrb[0].mxu0
    %v1153 = vadd.f32 0.0, %v1152
    %v1154 = vpop.f32.mrb[0].mxu0
    %1155 = vdwg.mxu0
    %1156 = vst [vmem:[#allocation2 + $0x60] sm:$0xff] %v1138
    %1157 = vst [vmem:[#allocation2 + $0x68] sm:$0xff] %v1143
    %1158 = vst [vmem:[#allocation2 + $0x70] sm:$0xff] %v1148
    %1159 = vst [vmem:[#allocation2 + $0x78] sm:$0xff] %v1153
    %v1160 = vld [vmem:[%s494] sm:$0xff]
    %v1161 = vld [vmem:[%s494 + $0x8] sm:$0xff]
    %v1162 = vld [vmem:[%s494 + $0x10] sm:$0xff]
    %v1163 = vld [vmem:[%s494 + $0x18] sm:$0xff]
    %v1164 = vld [vmem:[%s494 + $0x20] sm:$0xff]
    %v1165 = vld [vmem:[%s494 + $0x28] sm:$0xff]
    %v1166 = vld [vmem:[%s494 + $0x30] sm:$0xff]
    %v1167 = vld [vmem:[%s494 + $0x38] sm:$0xff]
    %v1168 = vld [vmem:[%s494 + $0x40] sm:$0xff]
    %v1169 = vld [vmem:[%s494 + $0x48] sm:$0xff]
    %v1170 = vld [vmem:[%s494 + $0x50] sm:$0xff]
    %v1171 = vld [vmem:[%s494 + $0x58] sm:$0xff]
    %v1172 = vld [vmem:[%s494 + $0x60] sm:$0xff]
    %v1173 = vld [vmem:[%s494 + $0x68] sm:$0xff]
    %v1174 = vld [vmem:[%s494 + $0x70] sm:$0xff]
    %v1175 = vld [vmem:[%s494 + $0x78] sm:$0xff]
    %1176 = vmatprep.subr.mxu0 0.0
    %1177 = vmatpush1.msra.mxu0 %v1160
    %1178 = vmatprep.subr.mxu0 0.0
    %1179 = vmatpush1.msra.mxu0 %v1161
    %1180 = vmatprep.subr.mxu0 0.0
    %1181 = vmatpush1.msra.mxu0 %v1162
    %1182 = vmatprep.subr.mxu0 0.0
    %1183 = vmatpush1.msra.mxu0 %v1163
    %1184 = vmatprep.subr.mxu0 0.0
    %1185 = vmatpush1.msra.mxu0 %v1164
    %1186 = vmatprep.subr.mxu0 0.0
    %1187 = vmatpush1.msra.mxu0 %v1165
    %1188 = vmatprep.subr.mxu0 0.0
    %1189 = vmatpush1.msra.mxu0 %v1166
    %1190 = vmatprep.subr.mxu0 0.0
    %1191 = vmatpush1.msra.mxu0 %v1167
    %1192 = vmatprep.subr.mxu0 0.0
    %1193 = vmatpush1.msra.mxu0 %v1168
    %1194 = vmatprep.subr.mxu0 0.0
    %1195 = vmatpush1.msra.mxu0 %v1169
    %1196 = vmatprep.subr.mxu0 0.0
    %1197 = vmatpush1.msra.mxu0 %v1170
    %1198 = vmatprep.subr.mxu0 0.0
    %1199 = vmatpush1.msra.mxu0 %v1171
    %1200 = vmatprep.subr.mxu0 0.0
    %1201 = vmatpush1.msra.mxu0 %v1172
    %1202 = vmatprep.subr.mxu0 0.0
    %1203 = vmatpush1.msra.mxu0 %v1173
    %1204 = vmatprep.subr.mxu0 0.0
    %1205 = vmatpush1.msra.mxu0 %v1174
    %1206 = vmatprep.subr.mxu0 0.0
    %1207 = vmatpush1.msra.mxu0 %v1175
    %1208 = vmatprep.subr.mxu0 0.0
    %1209 = vmatpush1.msra.mxu0 0.0
    %1210 = vmatprep.subr.mxu0 0.0
    %1211 = vmatpush1.msra.mxu0 0.0
    %1212 = vmatprep.subr.mxu0 0.0
    %1213 = vmatpush1.msra.mxu0 0.0
    %1214 = vmatprep.subr.mxu0 0.0
    %1215 = vmatpush1.msra.mxu0 0.0
    %1216 = vmatprep.subr.mxu0 0.0
    %1217 = vmatpush1.msra.mxu0 0.0
    %1218 = vmatprep.subr.mxu0 0.0
    %1219 = vmatpush1.msra.mxu0 0.0
    %1220 = vmatprep.subr.mxu0 0.0
    %1221 = vmatpush1.msra.mxu0 0.0
    %1222 = vmatprep.subr.mxu0 0.0
    %1223 = vmatpush1.msra.mxu0 0.0
    %1224 = vmatprep.subr.mxu0 0.0
    %1225 = vmatpush1.msra.mxu0 0.0
    %1226 = vmatprep.subr.mxu0 0.0
    %1227 = vmatpush1.msra.mxu0 0.0
    %1228 = vmatprep.subr.mxu0 0.0
    %1229 = vmatpush1.msra.mxu0 0.0
    %1230 = vmatprep.subr.mxu0 0.0
    %1231 = vmatpush1.msra.mxu0 0.0
    %1232 = vmatprep.subr.mxu0 0.0
    %1233 = vmatpush1.msra.mxu0 0.0
    %1234 = vmatprep.subr.mxu0 0.0
    %1235 = vmatpush1.msra.mxu0 0.0
    %1236 = vmatprep.subr.mxu0 0.0
    %1237 = vmatpush1.msra.mxu0 0.0
    %1238 = vmatprep.subr.mxu0 0.0
    %1239 = vmatpush1.msra.mxu0 0.0
    %1240 = vmatprep.mubr.f32.mxu0 0.0
    %1241 = vmatmul.mubr.f32.gmra.mrb[0].mxu0 %v736
    %v1242 = vpop.f32.mrb[0].mxu0
    %v1243 = vadd.f32 0.0, %v1242
    %v1244 = vpop.f32.mrb[0].mxu0
    %1245 = vmatprep.mubr.f32.mxu0 0.0
    %1246 = vmatmul.mubr.f32.gmra.mrb[0].mxu0 %v737
    %v1247 = vpop.f32.mrb[0].mxu0
    %v1248 = vadd.f32 0.0, %v1247
    %v1249 = vpop.f32.mrb[0].mxu0
    %1250 = vmatprep.mubr.f32.mxu0 0.0
    %1251 = vmatmul.mubr.f32.gmra.mrb[0].mxu0 %v738
    %v1252 = vpop.f32.mrb[0].mxu0
    %v1253 = vadd.f32 0.0, %v1252
    %v1254 = vpop.f32.mrb[0].mxu0
    %1255 = vmatprep.mubr.f32.mxu0 0.0
    %1256 = vmatmul.mubr.f32.gmra.mrb[0].mxu0 %v739
    %v1257 = vpop.f32.mrb[0].mxu0
    %v1258 = vadd.f32 0.0, %v1257
    %v1259 = vpop.f32.mrb[0].mxu0
    %1260 = vdwg.mxu0
    %1261 = vst [vmem:[#allocation2 + $0x80] sm:$0xff] %v1243
    %1262 = vst [vmem:[#allocation2 + $0x88] sm:$0xff] %v1248
    %1263 = vst [vmem:[#allocation2 + $0x90] sm:$0xff] %v1253
    %1264 = vst [vmem:[#allocation2 + $0x98] sm:$0xff] %v1258
    %v1265 = vld [vmem:[#allocation6] sm:$0xff]
    %v1266 = vld [vmem:[#allocation6 + $0x8] sm:$0xff]
    %v1267 = vld [vmem:[#allocation6 + $0x10] sm:$0xff]
    %v1268 = vld [vmem:[#allocation6 + $0x18] sm:$0xff]
    %v1269 = vld [vmem:[#allocation6 + $0x20] sm:$0xff]
    %v1270 = vld [vmem:[#allocation6 + $0x28] sm:$0xff]
    %v1271 = vld [vmem:[#allocation6 + $0x30] sm:$0xff]
    %v1272 = vld [vmem:[#allocation6 + $0x38] sm:$0xff]
    %v1273 = vld [vmem:[#allocation2] sm:$0xff]
    %v1274 = vld [vmem:[#allocation2 + $0x8] sm:$0xff]
    %v1275 = vld [vmem:[#allocation2 + $0x10] sm:$0xff]
    %v1276 = vld [vmem:[#allocation2 + $0x18] sm:$0xff]
    %v1277 = vld [vmem:[#allocation2 + $0x20] sm:$0xff]
    %v1278 = vld [vmem:[#allocation2 + $0x28] sm:$0xff]
    %v1279 = vld [vmem:[#allocation2 + $0x30] sm:$0xff]
    %v1280 = vld [vmem:[#allocation2 + $0x38] sm:$0xff]
    %v1281 = vld [vmem:[#allocation2 + $0x40] sm:$0xff]
    %v1282 = vld [vmem:[#allocation2 + $0x48] sm:$0xff]
    %v1283 = vld [vmem:[#allocation2 + $0x50] sm:$0xff]
    %v1284 = vld [vmem:[#allocation2 + $0x58] sm:$0xff]
    %v1285 = vld [vmem:[#allocation2 + $0x60] sm:$0xff]
    %v1286 = vld [vmem:[#allocation2 + $0x68] sm:$0xff]
    %v1287 = vld [vmem:[#allocation2 + $0x70] sm:$0xff]
    %v1288 = vld [vmem:[#allocation2 + $0x78] sm:$0xff]
    %v1289 = vld [vmem:[#allocation2 + $0x80] sm:$0xff]
    %v1290 = vld [vmem:[#allocation2 + $0x88] sm:$0xff]
    %v1291 = vld [vmem:[#allocation2 + $0x90] sm:$0xff]
    %v1292 = vld [vmem:[#allocation2 + $0x98] sm:$0xff]
    %v1294 = vsel %vm634, %v1266, 0
    %v1297 = vsel %vm634, %v1268, 0
    %v1300 = vsel %vm634, %v1270, 0
    %v1303 = vsel %vm634, %v1272, 0
    %1305 = vmatprep.subr.mxu0 0.0
    %1306 = vmatpush1.msra.mxu0 %v1273
    %1307 = vmatprep.subr.mxu0 0.0
    %1308 = vmatpush1.msra.mxu0 %v1274
    %1309 = vmatprep.subr.mxu0 0.0
    %1310 = vmatpush1.msra.mxu0 %v1275
    %1311 = vmatprep.subr.mxu0 0.0
    %1312 = vmatpush1.msra.mxu0 %v1276
    %1313 = vmatprep.subr.mxu0 0.0
    %1314 = vmatpush1.msra.mxu0 %v1277
    %1315 = vmatprep.subr.mxu0 0.0
    %1316 = vmatpush1.msra.mxu0 %v1278
    %1317 = vmatprep.subr.mxu0 0.0
    %1318 = vmatpush1.msra.mxu0 %v1279
    %1319 = vmatprep.subr.mxu0 0.0
    %1320 = vmatpush1.msra.mxu0 %v1280
    %1321 = vmatprep.subr.mxu0 0.0
    %1322 = vmatpush1.msra.mxu0 %v1281
    %1323 = vmatprep.subr.mxu0 0.0
    %1324 = vmatpush1.msra.mxu0 %v1282
    %1325 = vmatprep.subr.mxu0 0.0
    %1326 = vmatpush1.msra.mxu0 %v1283
    %1327 = vmatprep.subr.mxu0 0.0
    %1328 = vmatpush1.msra.mxu0 %v1284
    %1329 = vmatprep.subr.mxu0 0.0
    %1330 = vmatpush1.msra.mxu0 %v1285
    %1331 = vmatprep.subr.mxu0 0.0
    %1332 = vmatpush1.msra.mxu0 %v1286
    %1333 = vmatprep.subr.mxu0 0.0
    %1334 = vmatpush1.msra.mxu0 %v1287
    %1335 = vmatprep.subr.mxu0 0.0
    %1336 = vmatpush1.msra.mxu0 %v1288
    %1337 = vmatprep.subr.mxu0 0.0
    %1338 = vmatpush1.msra.mxu0 %v1289
    %1339 = vmatprep.subr.mxu0 0.0
    %1340 = vmatpush1.msra.mxu0 %v1290
    %1341 = vmatprep.subr.mxu0 0.0
    %1342 = vmatpush1.msra.mxu0 %v1291
    %1343 = vmatprep.subr.mxu0 0.0
    %1344 = vmatpush1.msra.mxu0 %v1292
    %1345 = vmatprep.subr.mxu0 0.0
    %1346 = vmatpush1.msra.mxu0 0.0
    %1347 = vmatprep.subr.mxu0 0.0
    %1348 = vmatpush1.msra.mxu0 0.0
    %1349 = vmatprep.subr.mxu0 0.0
    %1350 = vmatpush1.msra.mxu0 0.0
    %1351 = vmatprep.subr.mxu0 0.0
    %1352 = vmatpush1.msra.mxu0 0.0
    %1353 = vmatprep.subr.mxu0 0.0
    %1354 = vmatpush1.msra.mxu0 0.0
    %1355 = vmatprep.subr.mxu0 0.0
    %1356 = vmatpush1.msra.mxu0 0.0
    %1357 = vmatprep.subr.mxu0 0.0
    %1358 = vmatpush1.msra.mxu0 0.0
    %1359 = vmatprep.subr.mxu0 0.0
    %1360 = vmatpush1.msra.mxu0 0.0
    %1361 = vmatprep.subr.mxu0 0.0
    %1362 = vmatpush1.msra.mxu0 0.0
    %1363 = vmatprep.subr.mxu0 0.0
    %1364 = vmatpush1.msra.mxu0 0.0
    %1365 = vmatprep.subr.mxu0 0.0
    %1366 = vmatpush1.msra.mxu0 0.0
    %1367 = vmatprep.subr.mxu0 0.0
    %1368 = vmatpush1.msra.mxu0 0.0
    %1369 = vmatprep.mubr.f32.mxu0 %v1294
    %1370 = vmatmul.mubr.f32.gmra.mrb[0].mxu0 %v1265
    %v1371 = vpop.f32.mrb[0].mxu0
    %v1372 = vadd.f32 %v632, %v1371
    %v1373 = vpop.f32.mrb[0].mxu0
    %1374 = vmatprep.mubr.f32.mxu0 %v1297
    %1375 = vmatmul.mubr.f32.gmra.mrb[0].mxu0 %v1267
    %v1376 = vpop.f32.mrb[0].mxu0
    %v1377 = vadd.f32 %v632, %v1376
    %v1378 = vpop.f32.mrb[0].mxu0
    %1379 = vmatprep.mubr.f32.mxu0 %v1300
    %1380 = vmatmul.mubr.f32.gmra.mrb[0].mxu0 %v1269
    %v1381 = vpop.f32.mrb[0].mxu0
    %v1382 = vadd.f32 %v632, %v1381
    %v1383 = vpop.f32.mrb[0].mxu0
    %1384 = vmatprep.mubr.f32.mxu0 %v1303
    %1385 = vmatmul.mubr.f32.gmra.mrb[0].mxu0 %v1271
    %v1386 = vpop.f32.mrb[0].mxu0
    %v1387 = vadd.f32 %v632, %v1386
    %v1388 = vpop.f32.mrb[0].mxu0
    %1389 = vdwg.mxu0
    %1390 = vst [vmem:[#allocation12] sm:$0xff] %v1372
    %1391 = vst [vmem:[#allocation12 + $0x8] sm:$0xff] %v1377
    %1392 = vst [vmem:[#allocation12 + $0x10] sm:$0xff] %v1382
    %1393 = vst [vmem:[#allocation12 + $0x18] sm:$0xff] %v1387
    %v1394 = vld [vmem:[%s4] sm:$0xff]
    %v1396 = vsel %vm634, %v1394, 0
    %1398 = vmatprep.subr.mxu0 0.0
    %1399 = vmatpush1.msra.mxu0 %v1372
    %1400 = vmatprep.subr.mxu0 0.0
    %1401 = vmatpush1.msra.mxu0 %v1377
    %1402 = vmatprep.subr.mxu0 0.0
    %1403 = vmatpush1.msra.mxu0 %v1382
    %1404 = vmatprep.subr.mxu0 0.0
    %1405 = vmatpush1.msra.mxu0 %v1387
    %1406 = vmatprep.subr.mxu0 0.0
    %1407 = vmatpush1.msra.mxu0 0.0
    %1408 = vmatprep.subr.mxu0 0.0
    %1409 = vmatpush1.msra.mxu0 0.0
    %1410 = vmatprep.subr.mxu0 0.0
    %1411 = vmatpush1.msra.mxu0 0.0
    %1412 = vmatprep.subr.mxu0 0.0
    %1413 = vmatpush1.msra.mxu0 0.0
    %1414 = vmatprep.subr.mxu0 0.0
    %1415 = vmatpush1.msra.mxu0 0.0
    %1416 = vmatprep.subr.mxu0 0.0
    %1417 = vmatpush1.msra.mxu0 0.0
    %1418 = vmatprep.subr.mxu0 0.0
    %1419 = vmatpush1.msra.mxu0 0.0
    %1420 = vmatprep.subr.mxu0 0.0
    %1421 = vmatpush1.msra.mxu0 0.0
    %1422 = vmatprep.subr.mxu0 0.0
    %1423 = vmatpush1.msra.mxu0 0.0
    %1424 = vmatprep.subr.mxu0 0.0
    %1425 = vmatpush1.msra.mxu0 0.0
    %1426 = vmatprep.subr.mxu0 0.0
    %1427 = vmatpush1.msra.mxu0 0.0
    %1428 = vmatprep.subr.mxu0 0.0
    %1429 = vmatpush1.msra.mxu0 0.0
    %1430 = vmatprep.subr.mxu0 0.0
    %1431 = vmatpush1.msra.mxu0 0.0
    %1432 = vmatprep.subr.mxu0 0.0
    %1433 = vmatpush1.msra.mxu0 0.0
    %1434 = vmatprep.subr.mxu0 0.0
    %1435 = vmatpush1.msra.mxu0 0.0
    %1436 = vmatprep.subr.mxu0 0.0
    %1437 = vmatpush1.msra.mxu0 0.0
    %1438 = vmatprep.subr.mxu0 0.0
    %1439 = vmatpush1.msra.mxu0 0.0
    %1440 = vmatprep.subr.mxu0 0.0
    %1441 = vmatpush1.msra.mxu0 0.0
    %1442 = vmatprep.subr.mxu0 0.0
    %1443 = vmatpush1.msra.mxu0 0.0
    %1444 = vmatprep.subr.mxu0 0.0
    %1445 = vmatpush1.msra.mxu0 0.0
    %1446 = vmatprep.subr.mxu0 0.0
    %1447 = vmatpush1.msra.mxu0 0.0
    %1448 = vmatprep.subr.mxu0 0.0
    %1449 = vmatpush1.msra.mxu0 0.0
    %1450 = vmatprep.subr.mxu0 0.0
    %1451 = vmatpush1.msra.mxu0 0.0
    %1452 = vmatprep.subr.mxu0 0.0
    %1453 = vmatpush1.msra.mxu0 0.0
    %1454 = vmatprep.subr.mxu0 0.0
    %1455 = vmatpush1.msra.mxu0 0.0
    %1456 = vmatprep.subr.mxu0 0.0
    %1457 = vmatpush1.msra.mxu0 0.0
    %1458 = vmatprep.subr.mxu0 0.0
    %1459 = vmatpush1.msra.mxu0 0.0
    %1460 = vmatprep.subr.mxu0 0.0
    %1461 = vmatpush1.msra.mxu0 0.0
    %1462 = vmatprep.mubr.f32.mxu0 0.0
    %1463 = vmatmul.mubr.f32.gmra.mrb[0].mxu0 %v1396
    %v1464 = vpop.f32.mrb[0].mxu0
    %v1465 = vadd.f32 0.0, %v1464
    %v1466 = vpop.f32.mrb[0].mxu0
    %1467 = vdwg.mxu0
    %1468 = vst [vmem:[#allocation9] sm:$0xff] %v1465
    // Predicated region
    $region34: #{tpu_custom_call.1} parent=1 // pred_check
      _
    $region35: #{tpu_custom_call.1} parent=1 // pred_check_branch
      %1470 = sbr.rel (0) target = $region37
    $region36: #{tpu_custom_call.1} parent=1 // pred_region
      %s1472 = ssub.s32 128, 128
      %1473 = vsyncadd [#allocation5], %s1472
      %s1475 = sshll.u32 [#allocation9], 4
      %s1476 = int_to_ptr.vmem [resolvable:$true] %s1475
      %1478 = dma.vmem_to_hbm [thread:$0]  %s1476, 128, %s5, [#allocation5]
    $region37: #{tpu_custom_call.1} parent=1 // pred_fallthru
      _
    // Predicated region
    $region38: #{tpu_custom_call.1} parent=1 // pred_check
      _
    $region39: #{tpu_custom_call.1} parent=1 // pred_check_branch
      %1480 = sbr.rel (0) target = $region41
    $region40: #{tpu_custom_call.1} parent=1 // pred_region
      %s1482 = ssub.s32 512, 512
      %1483 = vsyncadd [#allocation11], %s1482
      %s1484 = sshll.u32 [#allocation10], 4
      %s1485 = int_to_ptr.vmem [resolvable:$true] %s1484
      %1490 = dma.vmem_to_hbm [thread:$0]  %s1485, 512, %s6, [#allocation11], 128, 128, 8
    $region41: #{tpu_custom_call.1} parent=1 // pred_fallthru
      _
    // Predicated region
    $region42: #{tpu_custom_call.1} parent=1 // pred_check
      _
    $region43: #{tpu_custom_call.1} parent=1 // pred_check_branch
      %1492 = sbr.rel (0) target = $region45
    $region44: #{tpu_custom_call.1} parent=1 // pred_region
      %s1494 = ssub.s32 512, 512
      %1495 = vsyncadd [#allocation11], %s1494
      %s1496 = sshll.u32 [#allocation12], 4
      %s1497 = int_to_ptr.vmem [resolvable:$true] %s1496
      %1502 = dma.vmem_to_hbm [thread:$0]  %s1497, 512, %s7, [#allocation11], 128, 128, 8
    $region45: #{tpu_custom_call.1} parent=1 // pred_fallthru
      _
    // Predicated region
    $region46: #{tpu_custom_call.1} parent=1 // pred_check
      _
    $region47: #{tpu_custom_call.1} parent=1 // pred_check_branch
      %1504 = sbr.rel (0) target = $region49
    $region48: #{tpu_custom_call.1} parent=1 // pred_region
      %1505 = dma.done [#allocation5], 128
    $region49: #{tpu_custom_call.1} parent=1 // pred_fallthru
      _
    // Predicated region
    $region50: #{tpu_custom_call.1} parent=1 // pred_check
      _
    $region51: #{tpu_custom_call.1} parent=1 // pred_check_branch
      %1507 = sbr.rel (0) target = $region53
    $region52: #{tpu_custom_call.1} parent=1 // pred_region
      %1508 = dma.done [#allocation11], 512
    $region53: #{tpu_custom_call.1} parent=1 // pred_fallthru
      _
    // Predicated region
    $region54: #{tpu_custom_call.1} parent=1 // pred_check
      _
    $region55: #{tpu_custom_call.1} parent=1 // pred_check_branch
      %1510 = sbr.rel (0) target = $region57
    $region56: #{tpu_custom_call.1} parent=1 // pred_region
      %1511 = dma.done [#allocation11], 512
    $region57: #{tpu_custom_call.1} parent=1 // pred_fallthru
      _
    %1512 = vsyncpa [#allocation4], 1
    %1513 = vsyncpa [#allocation7], 1
    %1514 = vsyncpa [#allocation5], 1
    %1515 = vsyncpa [#allocation11], 1

</llo_original>
